<compile_context>
chip_gen: v7x
topology: tpu7x:2x2x1
jax: 0.10.0
libtpu: 0.0.40
codegen_flags: <defaults>
</compile_context>

<pallas_src>
import functools

import jax
import jax.numpy as jnp
from jax.experimental import pallas as pl
from jax.experimental.pallas import tpu as pltpu


# ----------------------------------------------------------------------------
# Fused kernel: one (batch, row-band) grid step.
#   p_ref : (1, 1, 9*Cin, (TH+2)*W) bf16   conv1 im2col patches (rows: dy,dx,ci),
#                                          lanes: flat (row, col) incl. 1-row halo
#   w1_ref: (Cout, 9*Cin)   bf16           b1_ref: (Cout, 1) f32
#   w2_ref: (Cout, 9*Cout)  bf16           b2_ref: (Cout, 1) f32
#   wt_ref: (4*Cout, Cout)  bf16 (rows ky,kx,co)   bt_ref: (4*Cout, 1) f32
#   o_ref : (1, 4*Cout, TH*W) f32          lane-dense output band
# ----------------------------------------------------------------------------
def _upconv_kernel(p_ref, w1_ref, b1_ref, w2_ref, b2_ref, wt_ref, bt_ref,
                   o_ref, *, W, TH):
    t = pl.program_id(1)
    last = pl.num_programs(1) - 1
    M1 = (TH + 2) * W        # band rows incl. 1-row halo, flattened with W
    M2 = TH * W              # band output rows, flattened with W

    # ---- conv1 + ReLU: (Cout, 9Cin) @ (9Cin, M1) -> (Cout, M1), f32 accumulate ----
    pT = p_ref[0, 0, :, :]
    h1 = jnp.dot(w1_ref[...], pT, preferred_element_type=jnp.float32) + b1_ref[...]
    h1 = jnp.maximum(h1, 0.0)

    # conv2's zero padding in H: at the image top/bottom the halo rows were computed
    # from zero-padded patches (= relu(b1)) and must be exactly zero.
    m1 = jax.lax.broadcasted_iota(jnp.int32, (1, M1), 1)
    top_pad = jnp.logical_and(t == 0, m1 < W)
    bot_pad = jnp.logical_and(t == last, m1 >= (TH + 1) * W)
    h1 = jnp.where(jnp.logical_or(top_pad, bot_pad), 0.0, h1).astype(jnp.bfloat16)

    # One zero lane on each side = conv2's W zero padding at the flat-index level.
    zcol = jnp.zeros((h1.shape[0], 1), jnp.bfloat16)
    h1p = jnp.concatenate([zcol, h1, zcol], axis=1)              # (Cout, M1+2)

    # ---- conv2 im2col: 9 lane-window slices of the lane-dense h1.  A flat lane
    # shift crosses row boundaries exactly where conv2's W padding applies, so the
    # dx=0 / dx=2 taps are masked at w==0 / w==W-1. ----
    wcol = jax.lax.broadcasted_iota(jnp.int32, (1, M2), 1) % W
    not_left = wcol != 0
    not_right = wcol != (W - 1)
    taps = []
    for dy in range(3):
        for dx in range(3):
            v = h1p[:, dy * W + dx: dy * W + dx + M2]            # (Cout, M2) bf16
            if dx == 0:
                v = jnp.where(not_left, v, 0.0)
            elif dx == 2:
                v = jnp.where(not_right, v, 0.0)
            taps.append(v)
    p2 = jnp.concatenate(taps, axis=0)                           # (9*Cout, M2) bf16

    # ---- conv2 + ReLU: (Cout, 9Cout) @ (9Cout, M2) ----
    h2 = jnp.dot(w2_ref[...], p2, preferred_element_type=jnp.float32) + b2_ref[...]
    h2 = jnp.maximum(h2, 0.0).astype(jnp.bfloat16)               # (Cout, M2)

    # ---- ConvTranspose2d(k=2, s=2) == one matmul: rows ordered (ky, kx, co) ----
    y = jnp.dot(wt_ref[...], h2, preferred_element_type=jnp.float32) + bt_ref[...]
    o_ref[0] = y                                                 # (4*Cout, M2) f32


# ----------------------------------------------------------------------------
# tile_h from an explicit per-band VMEM budget (double-buffered I/O + temps).
# ----------------------------------------------------------------------------
def _pick_tile_h(H, W, Cin, Cout, budget_bytes=16 * 1024 * 1024):
    def rup(a, b):
        return (a + b - 1) // b * b

    def band_bytes(th):
        m1 = rup((th + 2) * W, 128)
        m2 = rup(th * W, 128)
        inp = rup(9 * Cin, 16) * m1 * 2                 # bf16 patch block
        out = 4 * Cout * m2 * 4                         # f32 output block
        tmp = (Cout * m1 * 6                            # h1 f32 + bf16
               + 2 * 9 * Cout * m2 * 2                  # taps + p2 (bf16)
               + Cout * m2 * 6                          # h2 f32 + bf16
               + 4 * Cout * m2 * 4)                     # y f32
        return 2 * (inp + out) + tmp                    # I/O double-buffered

    # Output block constraint: (th*W) % 128 == 0 unless th == H (full dim).
    valid = [th for th in range(1, H + 1)
             if H % th == 0 and (th == H or (th * W) % 128 == 0)]
    fitting = [th for th in valid if band_bytes(th) <= budget_bytes]
    return max(fitting) if fitting else min(valid)      # always non-empty (th=H valid)


# ----------------------------------------------------------------------------
# Parameters (deterministic, PyTorch-shaped) and forward pass.
# ----------------------------------------------------------------------------
def init_params(key, in_channels, out_channels):
    ks = jax.random.split(key, 6)
    s = 0.1
    return dict(
        W1=jax.random.normal(ks[0], (out_channels, in_channels, 3, 3), jnp.float32) * s,   # OIHW
        b1=jax.random.normal(ks[1], (out_channels,), jnp.float32) * s,
        W2=jax.random.normal(ks[2], (out_channels, out_channels, 3, 3), jnp.float32) * s,  # OIHW
        b2=jax.random.normal(ks[3], (out_channels,), jnp.float32) * s,
        Wt=jax.random.normal(ks[4], (out_channels, out_channels, 2, 2), jnp.float32) * s,  # (in,out,kH,kW)
        bt=jax.random.normal(ks[5], (out_channels,), jnp.float32) * s,
    )


def upconv_forward(x_nchw, params, *, tile_h=None):
    # x_nchw: (N, Cin, H, W)  ->  (N, Cout, 2H, 2W)
    N, Cin, H, W = x_nchw.shape
    Cout = params["W1"].shape[0]

    if tile_h is None:
        tile_h = _pick_tile_h(H, W, Cin, Cout)
    assert H % tile_h == 0
    TH = tile_h
    T = H // TH
    M1 = (TH + 2) * W
    M2 = TH * W

    # ---- conv1 im2col in the wrapper, banded with a 1-row halo, lane-dense bf16 ----
    x = jnp.transpose(x_nchw, (0, 2, 3, 1))                           # NHWC
    # pad 2 rows (conv1's pad + conv2's halo row) and 1 col (conv1's pad)
    xpp = jnp.pad(x, ((0, 0), (2, 2), (1, 1), (0, 0)))                # (N, H+4, W+2, Cin)
    patches = jnp.concatenate(
        [jnp.transpose(xpp[:, dy:dy + H + 2, dx:dx + W, :], (0, 3, 1, 2))
         for dy in range(3) for dx in range(3)],
        axis=1)                                                       # (N, 9Cin, H+2, W), rows (dy,dx,ci)
    ridx = jnp.arange(T)[:, None] * TH + jnp.arange(TH + 2)[None, :]  # (T, TH+2) band rows + halo
    pb = patches[:, :, ridx, :]                                       # (N, 9Cin, T, TH+2, W)
    pb = jnp.transpose(pb, (0, 2, 1, 3, 4)).reshape(N, T, 9 * Cin, M1).astype(jnp.bfloat16)

    # ---- weights in channel-major matmul form (bf16 for the MXU), f32 biases ----
    w1 = jnp.transpose(params["W1"], (0, 2, 3, 1)).reshape(Cout, 9 * Cin).astype(jnp.bfloat16)
    w2 = jnp.transpose(params["W2"], (0, 2, 3, 1)).reshape(Cout, 9 * Cout).astype(jnp.bfloat16)
    wt = jnp.transpose(params["Wt"], (2, 3, 1, 0)).reshape(4 * Cout, Cout).astype(jnp.bfloat16)
    b1 = params["b1"].reshape(Cout, 1)
    b2 = params["b2"].reshape(Cout, 1)
    bt = jnp.tile(params["bt"], 4).reshape(4 * Cout, 1)              # rows (ky,kx,co)

    kernel = functools.partial(_upconv_kernel, W=W, TH=TH)

    y = pl.pallas_call(
        kernel,
        out_shape=jax.ShapeDtypeStruct((N, 4 * Cout, H * W), jnp.float32),
        grid=(N, T),
        in_specs=[
            pl.BlockSpec((1, 1, 9 * Cin, M1), lambda n, t: (n, t, 0, 0)),
            pl.BlockSpec((Cout, 9 * Cin), lambda n, t: (0, 0)),
            pl.BlockSpec((Cout, 1), lambda n, t: (0, 0)),
            pl.BlockSpec((Cout, 9 * Cout), lambda n, t: (0, 0)),
            pl.BlockSpec((Cout, 1), lambda n, t: (0, 0)),
            pl.BlockSpec((4 * Cout, Cout), lambda n, t: (0, 0)),
            pl.BlockSpec((4 * Cout, 1), lambda n, t: (0, 0)),
        ],
        out_specs=pl.BlockSpec((1, 4 * Cout, M2), lambda n, t: (n, 0, t)),
        compiler_params=pltpu.CompilerParams(
            dimension_semantics=("parallel", "parallel"),
            vmem_limit_bytes=48 * 1024 * 1024),
    )(pb, w1, b1, w2, b2, wt, bt)                                    # (N, 4Cout, H*W)

    # De-interleave (ky, kx) and return NCHW; the reshapes are free, the single
    # transpose is the only XLA pass over the output.
    y = y.reshape(N, 2, 2, Cout, H, W)                               # (n, ky, kx, co, r, w)
    y = jnp.transpose(y, (0, 3, 4, 1, 5, 2)).reshape(N, Cout, 2 * H, 2 * W)
    return y


# ----------------------------------------------------------------------------
# Pure-JAX reference (same semantics as the PyTorch module, defaults: 2 convs).
# ----------------------------------------------------------------------------
def ref_forward(x, p):
    dn = ("NCHW", "OIHW", "NCHW")
    h = jax.lax.conv_general_dilated(x, p["W1"], (1, 1), ((1, 1), (1, 1)), dimension_numbers=dn)
    h = jax.nn.relu(h + p["b1"][None, :, None, None])
    h = jax.lax.conv_general_dilated(h, p["W2"], (1, 1), ((1, 1), (1, 1)), dimension_numbers=dn)
    h = jax.nn.relu(h + p["b2"][None, :, None, None])
    N, _, H, W = h.shape
    Cout = p["Wt"].shape[1]
    y = jnp.einsum("nchw,cokl->nohwkl", h, p["Wt"])                  # (N, Cout, H, W, 2, 2)
    y = jnp.transpose(y, (0, 1, 2, 4, 3, 5)).reshape(N, Cout, 2 * H, 2 * W)
    return y + p["bt"][None, :, None, None]


if __name__ == "__main__":
    key = jax.random.PRNGKey(0)
    kx, kp = jax.random.split(key)

    # Small shapes consistent with the module (UpConv(in_channels=4, out_channels=32)).
    N, Cin, H, W = 2, 4, 16, 16
    x = jax.random.normal(kx, (N, Cin, H, W), jnp.float32)
    params = init_params(kp, in_channels=Cin, out_channels=32)

    out = jax.jit(upconv_forward)(x, params)
    out = jax.block_until_ready(out)

    ref = ref_forward(x, params)
    assert out.shape == (N, 32, 2 * H, 2 * W), out.shape
    # bf16 MXU inputs with f32 accumulation -> compare against the f32 reference with
    # a correspondingly looser tolerance.
    max_err = float(jnp.max(jnp.abs(out - ref)))
    assert jnp.allclose(out, ref, rtol=5e-2, atol=5e-2), f"max abs err {max_err}"
    print("KERNEL_OK")
</pallas_src>

<mosaic_0001>
module attributes {stable_mosaic.version = 11 : i64} {
  func.func @_upconv_kernel(%arg0: i32, %arg1: i32, %arg2: memref<1x1x36x288xbf16, #tpu.memory_space<vmem>>, %arg3: memref<32x36xbf16, #tpu.memory_space<vmem>>, %arg4: memref<32x1xf32, #tpu.memory_space<vmem>>, %arg5: memref<32x288xbf16, #tpu.memory_space<vmem>>, %arg6: memref<32x1xf32, #tpu.memory_space<vmem>>, %arg7: memref<128x32xbf16, #tpu.memory_space<vmem>>, %arg8: memref<128x1xf32, #tpu.memory_space<vmem>>, %arg9: memref<1x128x256xf32, #tpu.memory_space<vmem>>) attributes {dimension_semantics = [#tpu.dimension_semantics<parallel>, #tpu.dimension_semantics<parallel>], iteration_bounds = array<i64: 2, 1>, scalar_prefetch = 0 : i64, scratch_operands = 0 : i64, tpu.core_type = #tpu.core_type<tc>, window_params = [{transform_indices = @transform_0, window_bounds = array<i64: 1, 1, 36, 288>}, {pipeline_mode = #tpu.pipeline_mode<synchronous>, transform_indices = @transform_1, window_bounds = array<i64: 32, 36>}, {pipeline_mode = #tpu.pipeline_mode<synchronous>, transform_indices = @transform_2, window_bounds = array<i64: 32, 1>}, {pipeline_mode = #tpu.pipeline_mode<synchronous>, transform_indices = @transform_3, window_bounds = array<i64: 32, 288>}, {pipeline_mode = #tpu.pipeline_mode<synchronous>, transform_indices = @transform_4, window_bounds = array<i64: 32, 1>}, {pipeline_mode = #tpu.pipeline_mode<synchronous>, transform_indices = @transform_5, window_bounds = array<i64: 128, 32>}, {pipeline_mode = #tpu.pipeline_mode<synchronous>, transform_indices = @transform_6, window_bounds = array<i64: 128, 1>}, {transform_indices = @transform_7, window_bounds = array<i64: 1, 128, 256>}]} {
    %c0 = arith.constant 0 : index
    %c0_0 = arith.constant 0 : index
    %c0_1 = arith.constant 0 : index
    %c0_2 = arith.constant 0 : index
    %0 = vector.load %arg2[%c0, %c0_0, %c0_1, %c0_2] : memref<1x1x36x288xbf16, #tpu.memory_space<vmem>>, vector<1x1x36x288xbf16>
    %1 = vector.shape_cast %0 : vector<1x1x36x288xbf16> to vector<36x288xbf16>
    %c0_3 = arith.constant 0 : index
    %c0_4 = arith.constant 0 : index
    %2 = vector.load %arg3[%c0_3, %c0_4] : memref<32x36xbf16, #tpu.memory_space<vmem>>, vector<32x36xbf16>
    %cst = arith.constant dense<0.000000e+00> : vector<32x288xf32>
    %3 = tpu.matmul %2, %1, %cst {dimension_numbers = #tpu.dot_dimension_numbers<[1], [0], [0], [1], [0, 0, 1, 1], [], []>} : vector<32x36xbf16>, vector<36x288xbf16>, vector<32x288xf32> -> vector<32x288xf32>
    %c0_5 = arith.constant 0 : index
    %c0_6 = arith.constant 0 : index
    %4 = vector.load %arg4[%c0_5, %c0_6] : memref<32x1xf32, #tpu.memory_space<vmem>>, vector<32x1xf32>
    %5 = vector.broadcast %4 : vector<32x1xf32> to vector<32x288xf32>
    %6 = arith.addf %3, %5 : vector<32x288xf32>
    %cst_7 = arith.constant 0.000000e+00 : f32
    %7 = vector.broadcast %cst_7 : f32 to vector<32x288xf32>
    %8 = arith.maximumf %6, %7 : vector<32x288xf32>
    %9 = tpu.iota {dimensions = array<i32: 1>} : vector<1x288xi32>
    %c0_i32 = arith.constant 0 : i32
    %10 = arith.cmpi eq, %arg1, %c0_i32 : i32
    %c16_i32 = arith.constant 16 : i32
    %11 = vector.broadcast %c16_i32 : i32 to vector<1x288xi32>
    %12 = arith.cmpi slt, %9, %11 : vector<1x288xi32>
    %13 = vector.broadcast %10 : i1 to vector<1x288xi1>
    %14 = arith.andi %13, %12 : vector<1x288xi1>
    %c0_i32_8 = arith.constant 0 : i32
    %15 = arith.cmpi eq, %arg1, %c0_i32_8 : i32
    %c272_i32 = arith.constant 272 : i32
    %16 = vector.broadcast %c272_i32 : i32 to vector<1x288xi32>
    %17 = arith.cmpi sge, %9, %16 : vector<1x288xi32>
    %18 = vector.broadcast %15 : i1 to vector<1x288xi1>
    %19 = arith.andi %18, %17 : vector<1x288xi1>
    %20 = arith.ori %14, %19 : vector<1x288xi1>
    %cst_9 = arith.constant 0.000000e+00 : f32
    %21 = vector.shape_cast %20 : vector<1x288xi1> to vector<1x288xi1>
    %22 = vector.broadcast %21 : vector<1x288xi1> to vector<32x288xi1>
    %23 = vector.broadcast %cst_9 : f32 to vector<32x288xf32>
    %24 = arith.select %22, %23, %8 : vector<32x288xi1>, vector<32x288xf32>
    %25 = arith.truncf %24 : vector<32x288xf32> to vector<32x288xbf16>
    %cst_10 = arith.constant 0.000000e+00 : bf16
    %26 = vector.broadcast %cst_10 : bf16 to vector<32x1xbf16>
    %27 = tpu.concatenate %26, %25, %26 in 1 : vector<32x1xbf16>, vector<32x288xbf16>, vector<32x1xbf16> -> vector<32x290xbf16>
    %28 = tpu.iota {dimensions = array<i32: 1>} : vector<1x256xi32>
    %c16_i32_11 = arith.constant 16 : i32
    %c0_i32_12 = arith.constant 0 : i32
    %29 = arith.cmpi eq, %c16_i32_11, %c0_i32_12 : i32
    %c1_i32 = arith.constant 1 : i32
    %30 = arith.select %29, %c1_i32, %c16_i32_11 : i32
    %31 = vector.broadcast %30 : i32 to vector<1x256xi32>
    %32 = arith.remsi %28, %31 : vector<1x256xi32>
    %c0_i32_13 = arith.constant 0 : i32
    %33 = vector.broadcast %c0_i32_13 : i32 to vector<1x256xi32>
    %34 = arith.cmpi ne, %32, %33 : vector<1x256xi32>
    %c0_i32_14 = arith.constant 0 : i32
    %35 = vector.broadcast %c0_i32_14 : i32 to vector<1x256xi32>
    %36 = arith.cmpi slt, %32, %35 : vector<1x256xi32>
    %c0_i32_15 = arith.constant 0 : i32
    %37 = arith.cmpi slt, %30, %c0_i32_15 : i32
    %38 = vector.broadcast %37 : i1 to vector<1x256xi1>
    %39 = vector.broadcast %38 : vector<1x256xi1> to vector<1x256xi1>
    %40 = arith.xori %36, %39 : vector<1x256xi1>
    %41 = arith.andi %40, %34 : vector<1x256xi1>
    %42 = vector.broadcast %30 : i32 to vector<1x256xi32>
    %43 = arith.addi %32, %42 : vector<1x256xi32>
    %44 = arith.select %41, %43, %32 : vector<1x256xi1>, vector<1x256xi32>
    %c0_i32_16 = arith.constant 0 : i32
    %45 = vector.broadcast %c0_i32_16 : i32 to vector<1x256xi32>
    %46 = arith.cmpi ne, %44, %45 : vector<1x256xi32>
    %c15_i32 = arith.constant 15 : i32
    %47 = vector.broadcast %c15_i32 : i32 to vector<1x256xi32>
    %48 = arith.cmpi ne, %44, %47 : vector<1x256xi32>
    %49 = vector.extract_strided_slice %27 {offsets = [0, 0], sizes = [32, 256], strides = [1, 1]} : vector<32x290xbf16> to vector<32x256xbf16>
    %cst_17 = arith.constant 0.000000e+00 : f32
    %50 = arith.truncf %cst_17 : f32 to bf16
    %51 = vector.shape_cast %46 : vector<1x256xi1> to vector<1x256xi1>
    %52 = vector.broadcast %51 : vector<1x256xi1> to vector<32x256xi1>
    %53 = vector.broadcast %50 : bf16 to vector<32x256xbf16>
    %54 = arith.select %52, %49, %53 : vector<32x256xi1>, vector<32x256xbf16>
    %55 = vector.extract_strided_slice %27 {offsets = [0, 1], sizes = [32, 256], strides = [1, 1]} : vector<32x290xbf16> to vector<32x256xbf16>
    %56 = vector.extract_strided_slice %27 {offsets = [0, 2], sizes = [32, 256], strides = [1, 1]} : vector<32x290xbf16> to vector<32x256xbf16>
    %cst_18 = arith.constant 0.000000e+00 : f32
    %57 = arith.truncf %cst_18 : f32 to bf16
    %58 = vector.shape_cast %48 : vector<1x256xi1> to vector<1x256xi1>
    %59 = vector.broadcast %58 : vector<1x256xi1> to vector<32x256xi1>
    %60 = vector.broadcast %57 : bf16 to vector<32x256xbf16>
    %61 = arith.select %59, %56, %60 : vector<32x256xi1>, vector<32x256xbf16>
    %62 = vector.extract_strided_slice %27 {offsets = [0, 16], sizes = [32, 256], strides = [1, 1]} : vector<32x290xbf16> to vector<32x256xbf16>
    %cst_19 = arith.constant 0.000000e+00 : f32
    %63 = arith.truncf %cst_19 : f32 to bf16
    %64 = vector.shape_cast %46 : vector<1x256xi1> to vector<1x256xi1>
    %65 = vector.broadcast %64 : vector<1x256xi1> to vector<32x256xi1>
    %66 = vector.broadcast %63 : bf16 to vector<32x256xbf16>
    %67 = arith.select %65, %62, %66 : vector<32x256xi1>, vector<32x256xbf16>
    %68 = vector.extract_strided_slice %27 {offsets = [0, 17], sizes = [32, 256], strides = [1, 1]} : vector<32x290xbf16> to vector<32x256xbf16>
    %69 = vector.extract_strided_slice %27 {offsets = [0, 18], sizes = [32, 256], strides = [1, 1]} : vector<32x290xbf16> to vector<32x256xbf16>
    %cst_20 = arith.constant 0.000000e+00 : f32
    %70 = arith.truncf %cst_20 : f32 to bf16
    %71 = vector.shape_cast %48 : vector<1x256xi1> to vector<1x256xi1>
    %72 = vector.broadcast %71 : vector<1x256xi1> to vector<32x256xi1>
    %73 = vector.broadcast %70 : bf16 to vector<32x256xbf16>
    %74 = arith.select %72, %69, %73 : vector<32x256xi1>, vector<32x256xbf16>
    %75 = vector.extract_strided_slice %27 {offsets = [0, 32], sizes = [32, 256], strides = [1, 1]} : vector<32x290xbf16> to vector<32x256xbf16>
    %cst_21 = arith.constant 0.000000e+00 : f32
    %76 = arith.truncf %cst_21 : f32 to bf16
    %77 = vector.shape_cast %46 : vector<1x256xi1> to vector<1x256xi1>
    %78 = vector.broadcast %77 : vector<1x256xi1> to vector<32x256xi1>
    %79 = vector.broadcast %76 : bf16 to vector<32x256xbf16>
    %80 = arith.select %78, %75, %79 : vector<32x256xi1>, vector<32x256xbf16>
    %81 = vector.extract_strided_slice %27 {offsets = [0, 33], sizes = [32, 256], strides = [1, 1]} : vector<32x290xbf16> to vector<32x256xbf16>
    %82 = vector.extract_strided_slice %27 {offsets = [0, 34], sizes = [32, 256], strides = [1, 1]} : vector<32x290xbf16> to vector<32x256xbf16>
    %cst_22 = arith.constant 0.000000e+00 : f32
    %83 = arith.truncf %cst_22 : f32 to bf16
    %84 = vector.shape_cast %48 : vector<1x256xi1> to vector<1x256xi1>
    %85 = vector.broadcast %84 : vector<1x256xi1> to vector<32x256xi1>
    %86 = vector.broadcast %83 : bf16 to vector<32x256xbf16>
    %87 = arith.select %85, %82, %86 : vector<32x256xi1>, vector<32x256xbf16>
    %88 = tpu.concatenate %54, %55, %61, %67, %68, %74, %80, %81, %87 in 0 : vector<32x256xbf16>, vector<32x256xbf16>, vector<32x256xbf16>, vector<32x256xbf16>, vector<32x256xbf16>, vector<32x256xbf16>, vector<32x256xbf16>, vector<32x256xbf16>, vector<32x256xbf16> -> vector<288x256xbf16>
    %c0_23 = arith.constant 0 : index
    %c0_24 = arith.constant 0 : index
    %89 = vector.load %arg5[%c0_23, %c0_24] : memref<32x288xbf16, #tpu.memory_space<vmem>>, vector<32x288xbf16>
    %cst_25 = arith.constant dense<0.000000e+00> : vector<32x256xf32>
    %90 = tpu.matmul %89, %88, %cst_25 {dimension_numbers = #tpu.dot_dimension_numbers<[1], [0], [0], [1], [0, 0, 1, 1], [], []>} : vector<32x288xbf16>, vector<288x256xbf16>, vector<32x256xf32> -> vector<32x256xf32>
    %c0_26 = arith.constant 0 : index
    %c0_27 = arith.constant 0 : index
    %91 = vector.load %arg6[%c0_26, %c0_27] : memref<32x1xf32, #tpu.memory_space<vmem>>, vector<32x1xf32>
    %92 = vector.broadcast %91 : vector<32x1xf32> to vector<32x256xf32>
    %93 = arith.addf %90, %92 : vector<32x256xf32>
    %cst_28 = arith.constant 0.000000e+00 : f32
    %94 = vector.broadcast %cst_28 : f32 to vector<32x256xf32>
    %95 = arith.maximumf %93, %94 : vector<32x256xf32>
    %96 = arith.truncf %95 : vector<32x256xf32> to vector<32x256xbf16>
    %c0_29 = arith.constant 0 : index
    %c0_30 = arith.constant 0 : index
    %97 = vector.load %arg7[%c0_29, %c0_30] : memref<128x32xbf16, #tpu.memory_space<vmem>>, vector<128x32xbf16>
    %cst_31 = arith.constant dense<0.000000e+00> : vector<128x256xf32>
    %98 = tpu.matmul %97, %96, %cst_31 {dimension_numbers = #tpu.dot_dimension_numbers<[1], [0], [0], [1], [0, 0, 1, 1], [], []>} : vector<128x32xbf16>, vector<32x256xbf16>, vector<128x256xf32> -> vector<128x256xf32>
    %c0_32 = arith.constant 0 : index
    %c0_33 = arith.constant 0 : index
    %99 = vector.load %arg8[%c0_32, %c0_33] : memref<128x1xf32, #tpu.memory_space<vmem>>, vector<128x1xf32>
    %100 = vector.broadcast %99 : vector<128x1xf32> to vector<128x256xf32>
    %101 = arith.addf %98, %100 : vector<128x256xf32>
    %c0_34 = arith.constant 0 : index
    %c0_35 = arith.constant 0 : index
    %c0_36 = arith.constant 0 : index
    %102 = vector.load %arg9[%c0_34, %c0_35, %c0_36] : memref<1x128x256xf32, #tpu.memory_space<vmem>>, vector<1x128x256xf32>
    %103 = vector.shape_cast %102 : vector<1x128x256xf32> to vector<128x256xf32>
    %104 = vector.shape_cast %101 : vector<128x256xf32> to vector<1x128x256xf32>
    tpu.vector_store %arg9[%c0_34, %c0_35, %c0_36], %104 {strides = array<i32>} : memref<1x128x256xf32, #tpu.memory_space<vmem>>, vector<1x128x256xf32>,
    return
  }
  func.func @transform_0(%arg0: i32, %arg1: i32) -> (i32, i32, i32, i32) {
    %c0_i32 = arith.constant 0 : i32
    %c0_i32_0 = arith.constant 0 : i32
    %c0_i32_1 = arith.constant 0 : i32
    return %arg0, %arg1, %c0_i32, %c0_i32_0 : i32, i32, i32, i32
  }
  func.func @transform_1(%arg0: i32, %arg1: i32) -> (i32, i32) {
    %c0_i32 = arith.constant 0 : i32
    %c0_i32_0 = arith.constant 0 : i32
    %c0_i32_1 = arith.constant 0 : i32
    return %c0_i32, %c0_i32_0 : i32, i32
  }
  func.func @transform_2(%arg0: i32, %arg1: i32) -> (i32, i32) {
    %c0_i32 = arith.constant 0 : i32
    %c0_i32_0 = arith.constant 0 : i32
    %c0_i32_1 = arith.constant 0 : i32
    return %c0_i32, %c0_i32_0 : i32, i32
  }
  func.func @transform_3(%arg0: i32, %arg1: i32) -> (i32, i32) {
    %c0_i32 = arith.constant 0 : i32
    %c0_i32_0 = arith.constant 0 : i32
    %c0_i32_1 = arith.constant 0 : i32
    return %c0_i32, %c0_i32_0 : i32, i32
  }
  func.func @transform_4(%arg0: i32, %arg1: i32) -> (i32, i32) {
    %c0_i32 = arith.constant 0 : i32
    %c0_i32_0 = arith.constant 0 : i32
    %c0_i32_1 = arith.constant 0 : i32
    return %c0_i32, %c0_i32_0 : i32, i32
  }
  func.func @transform_5(%arg0: i32, %arg1: i32) -> (i32, i32) {
    %c0_i32 = arith.constant 0 : i32
    %c0_i32_0 = arith.constant 0 : i32
    %c0_i32_1 = arith.constant 0 : i32
    return %c0_i32, %c0_i32_0 : i32, i32
  }
  func.func @transform_6(%arg0: i32, %arg1: i32) -> (i32, i32) {
    %c0_i32 = arith.constant 0 : i32
    %c0_i32_0 = arith.constant 0 : i32
    %c0_i32_1 = arith.constant 0 : i32
    return %c0_i32, %c0_i32_0 : i32, i32
  }
  func.func @transform_7(%arg0: i32, %arg1: i32) -> (i32, i32, i32) {
    %c0_i32 = arith.constant 0 : i32
    %c0_i32_0 = arith.constant 0 : i32
    return %arg0, %c0_i32, %arg1 : i32, i32, i32
  }
}

</mosaic_0001>

<llo_original>
// kernel: tile.8
$region0: #{tile.8}
  #allocation0 [shape = 's32[1]{0}', space=sflag, size = 0x4, scoped, tag = 'scoped memory for tile.8']
  %s0 = inlined_call_operand.vmem [shape: f32[32], index: 0, kind: input, shape index: {}]
  %s1 = inlined_call_operand.vmem [shape: f32[4,32], index: 1, kind: output, shape index: {}]
  // Predicated region
  $region2: #{tile.8} parent=0 // pred_check
    _
  $region3: #{tile.8} parent=0 // pred_check_branch
    %3 = sbr.rel (0) target = $region5
  $region4: #{tile.8} parent=0 // pred_region
    _
  $region5: #{tile.8} parent=0 // pred_fallthru
    _
  %v4 = vld [vmem:[%s0] ss:$0 sm:$0xff]
  %5 = vst [vmem:[%s1] sm:$0xf] %v4

// kernel: tile.0
$region0: #{tile.0}
  %s0 = inlined_call_operand.vmem [shape: f32[4,32], index: 0, kind: input, shape index: {}]
  %s1 = inlined_call_operand.vmem [shape: f32[128,1], index: 1, kind: output, shape index: {}]
  $region1: #{tile.0} parent=0
    #allocation0 [shape = 'u8[4096]{0}', space=vmem, size = 0x1000, scoped, tag = 'scoped mem for input reshape']
    %s3 = sshllo.u32 0, 4
    %v4 = vld [vmem:[%s0] sm:%s3]
    %5 = vst [vmem:[#allocation0] sm:%s3] %v4
    %v6 = vld [vmem:[#allocation0] sm:$0xf]
    %vm7 = vcmask 7168
    %8 = vst.msk [vmem:[%s1] sm:$0x1] %vm7, %v6
    %s9 = scalar_lea.vmem %s1, 31
    %10 = vst.msk [vmem:[%s9] sm:$0x2] %vm7, %v6
    %s11 = scalar_lea.vmem %s1, 62
    %12 = vst.msk [vmem:[%s11] sm:$0x4] %vm7, %v6
    %s13 = scalar_lea.vmem %s1, 93
    %14 = vst.msk [vmem:[%s13] sm:$0x8] %vm7, %v6
    %v15 = vld [vmem:[#allocation0] sm:$0xf]
    %16 = vrot.lane.b32.xlu0 %v15, 127
    %v17 = vpop.permute.xlu0 %16
    %vm18 = vcmask 7168
    %s19 = scalar_lea.vmem %s1, 1
    %20 = vst.msk [vmem:[%s19] sm:$0x1] %vm18, %v17
    %s21 = scalar_lea.vmem %s1, 32
    %22 = vst.msk [vmem:[%s21] sm:$0x2] %vm18, %v17
    %s23 = scalar_lea.vmem %s1, 63
    %24 = vst.msk [vmem:[%s23] sm:$0x4] %vm18, %v17
    %s25 = scalar_lea.vmem %s1, 94
    %26 = vst.msk [vmem:[%s25] sm:$0x8] %vm18, %v17
    %v27 = vld [vmem:[#allocation0] sm:$0xf]
    %28 = vrot.lane.b32.xlu0 %v27, 126
    %v29 = vpop.permute.xlu0 %28
    %vm30 = vcmask 7168
    %s31 = scalar_lea.vmem %s1, 2
    %32 = vst.msk [vmem:[%s31] sm:$0x1] %vm30, %v29
    %s33 = scalar_lea.vmem %s1, 33
    %34 = vst.msk [vmem:[%s33] sm:$0x2] %vm30, %v29
    %s35 = scalar_lea.vmem %s1, 64
    %36 = vst.msk [vmem:[%s35] sm:$0x4] %vm30, %v29
    %s37 = scalar_lea.vmem %s1, 95
    %38 = vst.msk [vmem:[%s37] sm:$0x8] %vm30, %v29
    %v39 = vld [vmem:[#allocation0] sm:$0xf]
    %40 = vrot.lane.b32.xlu0 %v39, 125
    %v41 = vpop.permute.xlu0 %40
    %vm42 = vcmask 7168
    %s43 = scalar_lea.vmem %s1, 3
    %44 = vst.msk [vmem:[%s43] sm:$0x1] %vm42, %v41
    %s45 = scalar_lea.vmem %s1, 34
    %46 = vst.msk [vmem:[%s45] sm:$0x2] %vm42, %v41
    %s47 = scalar_lea.vmem %s1, 65
    %48 = vst.msk [vmem:[%s47] sm:$0x4] %vm42, %v41
    %s49 = scalar_lea.vmem %s1, 96
    %50 = vst.msk [vmem:[%s49] sm:$0x8] %vm42, %v41
    %v51 = vld [vmem:[#allocation0] sm:$0xf]
    %52 = vrot.lane.b32.xlu0 %v51, 124
    %v53 = vpop.permute.xlu0 %52
    %vm54 = vcmask 7168
    %s55 = scalar_lea.vmem %s1, 4
    %56 = vst.msk [vmem:[%s55] sm:$0x1] %vm54, %v53
    %s57 = scalar_lea.vmem %s1, 35
    %58 = vst.msk [vmem:[%s57] sm:$0x2] %vm54, %v53
    %s59 = scalar_lea.vmem %s1, 66
    %60 = vst.msk [vmem:[%s59] sm:$0x4] %vm54, %v53
    %s61 = scalar_lea.vmem %s1, 97
    %62 = vst.msk [vmem:[%s61] sm:$0x8] %vm54, %v53
    %v63 = vld [vmem:[#allocation0] sm:$0xf]
    %64 = vrot.lane.b32.xlu0 %v63, 123
    %v65 = vpop.permute.xlu0 %64
    %vm66 = vcmask 7168
    %s67 = scalar_lea.vmem %s1, 5
    %68 = vst.msk [vmem:[%s67] sm:$0x1] %vm66, %v65
    %s69 = scalar_lea.vmem %s1, 36
    %70 = vst.msk [vmem:[%s69] sm:$0x2] %vm66, %v65
    %s71 = scalar_lea.vmem %s1, 67
    %72 = vst.msk [vmem:[%s71] sm:$0x4] %vm66, %v65
    %s73 = scalar_lea.vmem %s1, 98
    %74 = vst.msk [vmem:[%s73] sm:$0x8] %vm66, %v65
    %v75 = vld [vmem:[#allocation0] sm:$0xf]
    %76 = vrot.lane.b32.xlu0 %v75, 122
    %v77 = vpop.permute.xlu0 %76
    %vm78 = vcmask 7168
    %s79 = scalar_lea.vmem %s1, 6
    %80 = vst.msk [vmem:[%s79] sm:$0x1] %vm78, %v77
    %s81 = scalar_lea.vmem %s1, 37
    %82 = vst.msk [vmem:[%s81] sm:$0x2] %vm78, %v77
    %s83 = scalar_lea.vmem %s1, 68
    %84 = vst.msk [vmem:[%s83] sm:$0x4] %vm78, %v77
    %s85 = scalar_lea.vmem %s1, 99
    %86 = vst.msk [vmem:[%s85] sm:$0x8] %vm78, %v77
    %v87 = vld [vmem:[#allocation0] sm:$0xf]
    %88 = vrot.lane.b32.xlu0 %v87, 121
    %v89 = vpop.permute.xlu0 %88
    %vm90 = vcmask 7168
    %s91 = scalar_lea.vmem %s1, 7
    %92 = vst.msk [vmem:[%s91] sm:$0x1] %vm90, %v89
    %s93 = scalar_lea.vmem %s1, 38
    %94 = vst.msk [vmem:[%s93] sm:$0x2] %vm90, %v89
    %s95 = scalar_lea.vmem %s1, 69
    %96 = vst.msk [vmem:[%s95] sm:$0x4] %vm90, %v89
    %s97 = scalar_lea.vmem %s1, 100
    %98 = vst.msk [vmem:[%s97] sm:$0x8] %vm90, %v89
    %v99 = vld [vmem:[#allocation0] sm:$0xf]
    %100 = vrot.lane.b32.xlu0 %v99, 120
    %v101 = vpop.permute.xlu0 %100
    %vm102 = vcmask 7168
    %s103 = scalar_lea.vmem %s1, 8
    %104 = vst.msk [vmem:[%s103] sm:$0x1] %vm102, %v101
    %s105 = scalar_lea.vmem %s1, 39
    %106 = vst.msk [vmem:[%s105] sm:$0x2] %vm102, %v101
    %s107 = scalar_lea.vmem %s1, 70
    %108 = vst.msk [vmem:[%s107] sm:$0x4] %vm102, %v101
    %s109 = scalar_lea.vmem %s1, 101
    %110 = vst.msk [vmem:[%s109] sm:$0x8] %vm102, %v101
    %v111 = vld [vmem:[#allocation0] sm:$0xf]
    %112 = vrot.lane.b32.xlu0 %v111, 119
    %v113 = vpop.permute.xlu0 %112
    %vm114 = vcmask 7168
    %s115 = scalar_lea.vmem %s1, 9
    %116 = vst.msk [vmem:[%s115] sm:$0x1] %vm114, %v113
    %s117 = scalar_lea.vmem %s1, 40
    %118 = vst.msk [vmem:[%s117] sm:$0x2] %vm114, %v113
    %s119 = scalar_lea.vmem %s1, 71
    %120 = vst.msk [vmem:[%s119] sm:$0x4] %vm114, %v113
    %s121 = scalar_lea.vmem %s1, 102
    %122 = vst.msk [vmem:[%s121] sm:$0x8] %vm114, %v113
    %v123 = vld [vmem:[#allocation0] sm:$0xf]
    %124 = vrot.lane.b32.xlu0 %v123, 118
    %v125 = vpop.permute.xlu0 %124
    %vm126 = vcmask 7168
    %s127 = scalar_lea.vmem %s1, 10
    %128 = vst.msk [vmem:[%s127] sm:$0x1] %vm126, %v125
    %s129 = scalar_lea.vmem %s1, 41
    %130 = vst.msk [vmem:[%s129] sm:$0x2] %vm126, %v125
    %s131 = scalar_lea.vmem %s1, 72
    %132 = vst.msk [vmem:[%s131] sm:$0x4] %vm126, %v125
    %s133 = scalar_lea.vmem %s1, 103
    %134 = vst.msk [vmem:[%s133] sm:$0x8] %vm126, %v125
    %v135 = vld [vmem:[#allocation0] sm:$0xf]
    %136 = vrot.lane.b32.xlu0 %v135, 117
    %v137 = vpop.permute.xlu0 %136
    %vm138 = vcmask 7168
    %s139 = scalar_lea.vmem %s1, 11
    %140 = vst.msk [vmem:[%s139] sm:$0x1] %vm138, %v137
    %s141 = scalar_lea.vmem %s1, 42
    %142 = vst.msk [vmem:[%s141] sm:$0x2] %vm138, %v137
    %s143 = scalar_lea.vmem %s1, 73
    %144 = vst.msk [vmem:[%s143] sm:$0x4] %vm138, %v137
    %s145 = scalar_lea.vmem %s1, 104
    %146 = vst.msk [vmem:[%s145] sm:$0x8] %vm138, %v137
    %v147 = vld [vmem:[#allocation0] sm:$0xf]
    %148 = vrot.lane.b32.xlu0 %v147, 116
    %v149 = vpop.permute.xlu0 %148
    %vm150 = vcmask 7168
    %s151 = scalar_lea.vmem %s1, 12
    %152 = vst.msk [vmem:[%s151] sm:$0x1] %vm150, %v149
    %s153 = scalar_lea.vmem %s1, 43
    %154 = vst.msk [vmem:[%s153] sm:$0x2] %vm150, %v149
    %s155 = scalar_lea.vmem %s1, 74
    %156 = vst.msk [vmem:[%s155] sm:$0x4] %vm150, %v149
    %s157 = scalar_lea.vmem %s1, 105
    %158 = vst.msk [vmem:[%s157] sm:$0x8] %vm150, %v149
    %v159 = vld [vmem:[#allocation0] sm:$0xf]
    %160 = vrot.lane.b32.xlu0 %v159, 115
    %v161 = vpop.permute.xlu0 %160
    %vm162 = vcmask 7168
    %s163 = scalar_lea.vmem %s1, 13
    %164 = vst.msk [vmem:[%s163] sm:$0x1] %vm162, %v161
    %s165 = scalar_lea.vmem %s1, 44
    %166 = vst.msk [vmem:[%s165] sm:$0x2] %vm162, %v161
    %s167 = scalar_lea.vmem %s1, 75
    %168 = vst.msk [vmem:[%s167] sm:$0x4] %vm162, %v161
    %s169 = scalar_lea.vmem %s1, 106
    %170 = vst.msk [vmem:[%s169] sm:$0x8] %vm162, %v161
    %v171 = vld [vmem:[#allocation0] sm:$0xf]
    %172 = vrot.lane.b32.xlu0 %v171, 114
    %v173 = vpop.permute.xlu0 %172
    %vm174 = vcmask 7168
    %s175 = scalar_lea.vmem %s1, 14
    %176 = vst.msk [vmem:[%s175] sm:$0x1] %vm174, %v173
    %s177 = scalar_lea.vmem %s1, 45
    %178 = vst.msk [vmem:[%s177] sm:$0x2] %vm174, %v173
    %s179 = scalar_lea.vmem %s1, 76
    %180 = vst.msk [vmem:[%s179] sm:$0x4] %vm174, %v173
    %s181 = scalar_lea.vmem %s1, 107
    %182 = vst.msk [vmem:[%s181] sm:$0x8] %vm174, %v173
    %v183 = vld [vmem:[#allocation0] sm:$0xf]
    %184 = vrot.lane.b32.xlu0 %v183, 113
    %v185 = vpop.permute.xlu0 %184
    %vm186 = vcmask 7168
    %s187 = scalar_lea.vmem %s1, 15
    %188 = vst.msk [vmem:[%s187] sm:$0x1] %vm186, %v185
    %s189 = scalar_lea.vmem %s1, 46
    %190 = vst.msk [vmem:[%s189] sm:$0x2] %vm186, %v185
    %s191 = scalar_lea.vmem %s1, 77
    %192 = vst.msk [vmem:[%s191] sm:$0x4] %vm186, %v185
    %s193 = scalar_lea.vmem %s1, 108
    %194 = vst.msk [vmem:[%s193] sm:$0x8] %vm186, %v185
    %v195 = vld [vmem:[#allocation0] sm:$0xf]
    %196 = vrot.lane.b32.xlu0 %v195, 112
    %v197 = vpop.permute.xlu0 %196
    %vm198 = vcmask 7168
    %s199 = scalar_lea.vmem %s1, 16
    %200 = vst.msk [vmem:[%s199] sm:$0x1] %vm198, %v197
    %s201 = scalar_lea.vmem %s1, 47
    %202 = vst.msk [vmem:[%s201] sm:$0x2] %vm198, %v197
    %s203 = scalar_lea.vmem %s1, 78
    %204 = vst.msk [vmem:[%s203] sm:$0x4] %vm198, %v197
    %s205 = scalar_lea.vmem %s1, 109
    %206 = vst.msk [vmem:[%s205] sm:$0x8] %vm198, %v197
    %v207 = vld [vmem:[#allocation0] sm:$0xf]
    %208 = vrot.lane.b32.xlu0 %v207, 111
    %v209 = vpop.permute.xlu0 %208
    %vm210 = vcmask 7168
    %s211 = scalar_lea.vmem %s1, 17
    %212 = vst.msk [vmem:[%s211] sm:$0x1] %vm210, %v209
    %s213 = scalar_lea.vmem %s1, 48
    %214 = vst.msk [vmem:[%s213] sm:$0x2] %vm210, %v209
    %s215 = scalar_lea.vmem %s1, 79
    %216 = vst.msk [vmem:[%s215] sm:$0x4] %vm210, %v209
    %s217 = scalar_lea.vmem %s1, 110
    %218 = vst.msk [vmem:[%s217] sm:$0x8] %vm210, %v209
    %v219 = vld [vmem:[#allocation0] sm:$0xf]
    %220 = vrot.lane.b32.xlu0 %v219, 110
    %v221 = vpop.permute.xlu0 %220
    %vm222 = vcmask 7168
    %s223 = scalar_lea.vmem %s1, 18
    %224 = vst.msk [vmem:[%s223] sm:$0x1] %vm222, %v221
    %s225 = scalar_lea.vmem %s1, 49
    %226 = vst.msk [vmem:[%s225] sm:$0x2] %vm222, %v221
    %s227 = scalar_lea.vmem %s1, 80
    %228 = vst.msk [vmem:[%s227] sm:$0x4] %vm222, %v221
    %s229 = scalar_lea.vmem %s1, 111
    %230 = vst.msk [vmem:[%s229] sm:$0x8] %vm222, %v221
    %v231 = vld [vmem:[#allocation0] sm:$0xf]
    %232 = vrot.lane.b32.xlu0 %v231, 109
    %v233 = vpop.permute.xlu0 %232
    %vm234 = vcmask 7168
    %s235 = scalar_lea.vmem %s1, 19
    %236 = vst.msk [vmem:[%s235] sm:$0x1] %vm234, %v233
    %s237 = scalar_lea.vmem %s1, 50
    %238 = vst.msk [vmem:[%s237] sm:$0x2] %vm234, %v233
    %s239 = scalar_lea.vmem %s1, 81
    %240 = vst.msk [vmem:[%s239] sm:$0x4] %vm234, %v233
    %s241 = scalar_lea.vmem %s1, 112
    %242 = vst.msk [vmem:[%s241] sm:$0x8] %vm234, %v233
    %v243 = vld [vmem:[#allocation0] sm:$0xf]
    %244 = vrot.lane.b32.xlu0 %v243, 108
    %v245 = vpop.permute.xlu0 %244
    %vm246 = vcmask 7168
    %s247 = scalar_lea.vmem %s1, 20
    %248 = vst.msk [vmem:[%s247] sm:$0x1] %vm246, %v245
    %s249 = scalar_lea.vmem %s1, 51
    %250 = vst.msk [vmem:[%s249] sm:$0x2] %vm246, %v245
    %s251 = scalar_lea.vmem %s1, 82
    %252 = vst.msk [vmem:[%s251] sm:$0x4] %vm246, %v245
    %s253 = scalar_lea.vmem %s1, 113
    %254 = vst.msk [vmem:[%s253] sm:$0x8] %vm246, %v245
    %v255 = vld [vmem:[#allocation0] sm:$0xf]
    %256 = vrot.lane.b32.xlu0 %v255, 107
    %v257 = vpop.permute.xlu0 %256
    %vm258 = vcmask 7168
    %s259 = scalar_lea.vmem %s1, 21
    %260 = vst.msk [vmem:[%s259] sm:$0x1] %vm258, %v257
    %s261 = scalar_lea.vmem %s1, 52
    %262 = vst.msk [vmem:[%s261] sm:$0x2] %vm258, %v257
    %s263 = scalar_lea.vmem %s1, 83
    %264 = vst.msk [vmem:[%s263] sm:$0x4] %vm258, %v257
    %s265 = scalar_lea.vmem %s1, 114
    %266 = vst.msk [vmem:[%s265] sm:$0x8] %vm258, %v257
    %v267 = vld [vmem:[#allocation0] sm:$0xf]
    %268 = vrot.lane.b32.xlu0 %v267, 106
    %v269 = vpop.permute.xlu0 %268
    %vm270 = vcmask 7168
    %s271 = scalar_lea.vmem %s1, 22
    %272 = vst.msk [vmem:[%s271] sm:$0x1] %vm270, %v269
    %s273 = scalar_lea.vmem %s1, 53
    %274 = vst.msk [vmem:[%s273] sm:$0x2] %vm270, %v269
    %s275 = scalar_lea.vmem %s1, 84
    %276 = vst.msk [vmem:[%s275] sm:$0x4] %vm270, %v269
    %s277 = scalar_lea.vmem %s1, 115
    %278 = vst.msk [vmem:[%s277] sm:$0x8] %vm270, %v269
    %v279 = vld [vmem:[#allocation0] sm:$0xf]
    %280 = vrot.lane.b32.xlu0 %v279, 105
    %v281 = vpop.permute.xlu0 %280
    %vm282 = vcmask 7168
    %s283 = scalar_lea.vmem %s1, 23
    %284 = vst.msk [vmem:[%s283] sm:$0x1] %vm282, %v281
    %s285 = scalar_lea.vmem %s1, 54
    %286 = vst.msk [vmem:[%s285] sm:$0x2] %vm282, %v281
    %s287 = scalar_lea.vmem %s1, 85
    %288 = vst.msk [vmem:[%s287] sm:$0x4] %vm282, %v281
    %s289 = scalar_lea.vmem %s1, 116
    %290 = vst.msk [vmem:[%s289] sm:$0x8] %vm282, %v281
    %v291 = vld [vmem:[#allocation0] sm:$0xf]
    %292 = vrot.lane.b32.xlu0 %v291, 104
    %v293 = vpop.permute.xlu0 %292
    %vm294 = vcmask 7168
    %s295 = scalar_lea.vmem %s1, 24
    %296 = vst.msk [vmem:[%s295] sm:$0x1] %vm294, %v293
    %s297 = scalar_lea.vmem %s1, 55
    %298 = vst.msk [vmem:[%s297] sm:$0x2] %vm294, %v293
    %s299 = scalar_lea.vmem %s1, 86
    %300 = vst.msk [vmem:[%s299] sm:$0x4] %vm294, %v293
    %s301 = scalar_lea.vmem %s1, 117
    %302 = vst.msk [vmem:[%s301] sm:$0x8] %vm294, %v293
    %v303 = vld [vmem:[#allocation0] sm:$0xf]
    %304 = vrot.lane.b32.xlu0 %v303, 103
    %v305 = vpop.permute.xlu0 %304
    %vm306 = vcmask 7168
    %s307 = scalar_lea.vmem %s1, 25
    %308 = vst.msk [vmem:[%s307] sm:$0x1] %vm306, %v305
    %s309 = scalar_lea.vmem %s1, 56
    %310 = vst.msk [vmem:[%s309] sm:$0x2] %vm306, %v305
    %s311 = scalar_lea.vmem %s1, 87
    %312 = vst.msk [vmem:[%s311] sm:$0x4] %vm306, %v305
    %s313 = scalar_lea.vmem %s1, 118
    %314 = vst.msk [vmem:[%s313] sm:$0x8] %vm306, %v305
    %v315 = vld [vmem:[#allocation0] sm:$0xf]
    %316 = vrot.lane.b32.xlu0 %v315, 102
    %v317 = vpop.permute.xlu0 %316
    %vm318 = vcmask 7168
    %s319 = scalar_lea.vmem %s1, 26
    %320 = vst.msk [vmem:[%s319] sm:$0x1] %vm318, %v317
    %s321 = scalar_lea.vmem %s1, 57
    %322 = vst.msk [vmem:[%s321] sm:$0x2] %vm318, %v317
    %s323 = scalar_lea.vmem %s1, 88
    %324 = vst.msk [vmem:[%s323] sm:$0x4] %vm318, %v317
    %s325 = scalar_lea.vmem %s1, 119
    %326 = vst.msk [vmem:[%s325] sm:$0x8] %vm318, %v317
    %v327 = vld [vmem:[#allocation0] sm:$0xf]
    %328 = vrot.lane.b32.xlu0 %v327, 101
    %v329 = vpop.permute.xlu0 %328
    %vm330 = vcmask 7168
    %s331 = scalar_lea.vmem %s1, 27
    %332 = vst.msk [vmem:[%s331] sm:$0x1] %vm330, %v329
    %s333 = scalar_lea.vmem %s1, 58
    %334 = vst.msk [vmem:[%s333] sm:$0x2] %vm330, %v329
    %s335 = scalar_lea.vmem %s1, 89
    %336 = vst.msk [vmem:[%s335] sm:$0x4] %vm330, %v329
    %s337 = scalar_lea.vmem %s1, 120
    %338 = vst.msk [vmem:[%s337] sm:$0x8] %vm330, %v329
    %v339 = vld [vmem:[#allocation0] sm:$0xf]
    %340 = vrot.lane.b32.xlu0 %v339, 100
    %v341 = vpop.permute.xlu0 %340
    %vm342 = vcmask 7168
    %s343 = scalar_lea.vmem %s1, 28
    %344 = vst.msk [vmem:[%s343] sm:$0x1] %vm342, %v341
    %s345 = scalar_lea.vmem %s1, 59
    %346 = vst.msk [vmem:[%s345] sm:$0x2] %vm342, %v341
    %s347 = scalar_lea.vmem %s1, 90
    %348 = vst.msk [vmem:[%s347] sm:$0x4] %vm342, %v341
    %s349 = scalar_lea.vmem %s1, 121
    %350 = vst.msk [vmem:[%s349] sm:$0x8] %vm342, %v341
    %v351 = vld [vmem:[#allocation0] sm:$0xf]
    %352 = vrot.lane.b32.xlu0 %v351, 99
    %v353 = vpop.permute.xlu0 %352
    %vm354 = vcmask 7168
    %s355 = scalar_lea.vmem %s1, 29
    %356 = vst.msk [vmem:[%s355] sm:$0x1] %vm354, %v353
    %s357 = scalar_lea.vmem %s1, 60
    %358 = vst.msk [vmem:[%s357] sm:$0x2] %vm354, %v353
    %s359 = scalar_lea.vmem %s1, 91
    %360 = vst.msk [vmem:[%s359] sm:$0x4] %vm354, %v353
    %s361 = scalar_lea.vmem %s1, 122
    %362 = vst.msk [vmem:[%s361] sm:$0x8] %vm354, %v353
    %v363 = vld [vmem:[#allocation0] sm:$0xf]
    %364 = vrot.lane.b32.xlu0 %v363, 98
    %v365 = vpop.permute.xlu0 %364
    %vm366 = vcmask 7168
    %s367 = scalar_lea.vmem %s1, 30
    %368 = vst.msk [vmem:[%s367] sm:$0x1] %vm366, %v365
    %s369 = scalar_lea.vmem %s1, 61
    %370 = vst.msk [vmem:[%s369] sm:$0x2] %vm366, %v365
    %s371 = scalar_lea.vmem %s1, 92
    %372 = vst.msk [vmem:[%s371] sm:$0x4] %vm366, %v365
    %s373 = scalar_lea.vmem %s1, 123
    %374 = vst.msk [vmem:[%s373] sm:$0x8] %vm366, %v365
    %v375 = vld [vmem:[#allocation0] sm:$0xf]
    %376 = vrot.lane.b32.xlu0 %v375, 97
    %v377 = vpop.permute.xlu0 %376
    %vm378 = vcmask 7168
    %s379 = scalar_lea.vmem %s1, 31
    %380 = vst.msk [vmem:[%s379] sm:$0x1] %vm378, %v377
    %s381 = scalar_lea.vmem %s1, 62
    %382 = vst.msk [vmem:[%s381] sm:$0x2] %vm378, %v377
    %s383 = scalar_lea.vmem %s1, 93
    %384 = vst.msk [vmem:[%s383] sm:$0x4] %vm378, %v377
    %s385 = scalar_lea.vmem %s1, 124
    %386 = vst.msk [vmem:[%s385] sm:$0x8] %vm378, %v377

// kernel: upconv_forward.1
$region0: #{upconv_forward.1}
  #allocation0 [shape = 'u32[]', space=smem, size = 0x4, offset = 0x4, fixed_abs, tag = 'smem constant byte address 0x4 - core index']
  #allocation1 [shape = 'u32[144,128]{1,0:T(1,128)}', space=vmem, size = 0x12000, scoped, tag = 'internal scratch']
  %s0 = inlined_call_operand.vmem [shape: bf16[2,1,36,288], index: 0, kind: input, shape index: {}]
  %s1 = inlined_call_operand.vmem [shape: bf16[32,36], index: 1, kind: input, shape index: {}]
  %s2 = inlined_call_operand.vmem [shape: f32[32,1], index: 2, kind: input, shape index: {}]
  %s3 = inlined_call_operand.vmem [shape: bf16[32,288], index: 3, kind: input, shape index: {}]
  %s4 = inlined_call_operand.vmem [shape: f32[32,1], index: 4, kind: input, shape index: {}]
  %s5 = inlined_call_operand.vmem [shape: bf16[128,32], index: 5, kind: input, shape index: {}]
  %s6 = inlined_call_operand.vmem [shape: f32[128,1], index: 6, kind: input, shape index: {}]
  %s7 = inlined_call_operand.vmem [shape: f32[2,128,256], index: 7, kind: output, shape index: {}]
  %s8 = sld [smem:[#allocation0]]
  $region61: #{upconv_forward.1} parent=0
    _
  %s10 = ssub.s32 1, %s8
  %s11 = scalar_select 0, %s10, %s8
  loop: start=0, step=1, limit=4
  $region2: #{upconv_forward.1} parent=0 // loop_pre_header
    _
  $region3: #{upconv_forward.1} parent=0 // loop_header
    %s13 = sphi 0, %s17
    %p14 = scmp.ge.s32.totalorder %s13, 4
    %s20 = sphi 0, %s32
    %s21 = sphi 0, %s28
    %s22 = sphi 0, %s20
    %s23 = sphi 0, %s21
    %s24 = sphi 0, %s22
    %s25 = sphi 0, %s23
    %s37 = sphi 0, %s39
    %s40 = sphi 0, %s37
    %s41 = sphi 0, %s40
    %s57 = sphi 0, %s41
    %s61 = sphi 0, %s61
    %s63 = sphi 0, %s61
    %s64 = sphi 0, %s63
    %s78 = sphi 0, %s64
    %s82 = sphi 0, %s82
    %s84 = sphi 0, %s82
    %s85 = sphi 0, %s84
    %s99 = sphi 0, %s85
    %s103 = sphi 0, %s103
    %s105 = sphi 0, %s103
    %s106 = sphi 0, %s105
    %s120 = sphi 0, %s106
    %s124 = sphi 0, %s124
    %s126 = sphi 0, %s124
    %s127 = sphi 0, %s126
    %s141 = sphi 0, %s127
    %s145 = sphi 0, %s145
    %s147 = sphi 0, %s145
    %s148 = sphi 0, %s147
    %s162 = sphi 0, %s148
    %s166 = sphi 0, %s166
    %s168 = sphi 0, %s166
    %s169 = sphi 0, %s168
    %s183 = sphi 0, %s169
    %s191 = sphi 0, %s193
    %s194 = sphi 0, %s191
    %s195 = sphi 0, %s194
    %s211 = sphi 0, %s195
  $region4: #{upconv_forward.1} parent=0 // loop_header_branch
    %16 = sbr.rel (%p14) target = $region8
  $region5: #{upconv_forward.1} parent=0 // loop_body
    %s18 = ssub.s32 %s13, 1
    %s19 = ssub.s32 %s13, 2
    %s26 = sadd.s32 1, %s21
    %p27 = scmp.ge.s32.totalorder %s26, 1
    %s28 = scalar_select %p27, 0, %s26
    %s29 = sadd.s32 1, %s20
    %s30 = scalar_select %p27, %s29, %s20
    %p31 = scmp.ge.s32.totalorder %s30, 2
    %s32 = scalar_select %p31, 0, %s30
    %s33 = ssub.s32 %s20, %s32
    %s34 = ssub.s32 %s21, %s28
    %s35 = sor.u32 %s33, %s34
    %p36 = scmp.eq.s32.totalorder %s35, 0
    %s38 = sadd.s32 %s37, 1
    %s39 = scalar_select %p36, %s37, %s38
    %p42 = pneg %p36
    %p43 = scmp.eq.s32.totalorder %s13, 1
    %p44 = por %p42, %p43
    %p45 = scmp.ne.s32.totalorder %s37, %s40
    %p46 = scmp.eq.s32.totalorder %s13, 0
    %p47 = por %p45, %p46
    %p48 = scmp.ne.s32.totalorder %s37, %s40
    %p49 = scmp.eq.s32.totalorder %s18, 1
    %p50 = por %p48, %p49
    %p51 = scmp.ne.s32.totalorder %s40, %s41
    %p52 = scmp.eq.s32.totalorder %s18, 0
    %p53 = por %p51, %p52
    %p54 = scmp.ne.s32.totalorder %s40, %s41
    %p55 = scmp.eq.s32.totalorder %s19, 1
    %p56 = por %p54, %p55
    %p58 = scmp.ne.s32.totalorder %s41, %s57
    %p59 = scmp.eq.s32.totalorder %s19, 0
    %p60 = por %p58, %p59
    %s62 = sadd.s32 %s61, 1
    %p65 = scmp.eq.s32.totalorder %s13, 1
    %p66 = scmp.ne.s32.totalorder %s61, %s63
    %p67 = scmp.eq.s32.totalorder %s13, 0
    %p68 = por %p66, %p67
    %p69 = scmp.ne.s32.totalorder %s61, %s63
    %p70 = scmp.eq.s32.totalorder %s18, 1
    %p71 = por %p69, %p70
    %p72 = scmp.ne.s32.totalorder %s63, %s64
    %p73 = scmp.eq.s32.totalorder %s18, 0
    %p74 = por %p72, %p73
    %p75 = scmp.ne.s32.totalorder %s63, %s64
    %p76 = scmp.eq.s32.totalorder %s19, 1
    %p77 = por %p75, %p76
    %p79 = scmp.ne.s32.totalorder %s64, %s78
    %p80 = scmp.eq.s32.totalorder %s19, 0
    %p81 = por %p79, %p80
    %s83 = sadd.s32 %s82, 1
    %p86 = scmp.eq.s32.totalorder %s13, 1
    %p87 = scmp.ne.s32.totalorder %s82, %s84
    %p88 = scmp.eq.s32.totalorder %s13, 0
    %p89 = por %p87, %p88
    %p90 = scmp.ne.s32.totalorder %s82, %s84
    %p91 = scmp.eq.s32.totalorder %s18, 1
    %p92 = por %p90, %p91
    %p93 = scmp.ne.s32.totalorder %s84, %s85
    %p94 = scmp.eq.s32.totalorder %s18, 0
    %p95 = por %p93, %p94
    %p96 = scmp.ne.s32.totalorder %s84, %s85
    %p97 = scmp.eq.s32.totalorder %s19, 1
    %p98 = por %p96, %p97
    %p100 = scmp.ne.s32.totalorder %s85, %s99
    %p101 = scmp.eq.s32.totalorder %s19, 0
    %p102 = por %p100, %p101
    %s104 = sadd.s32 %s103, 1
    %p107 = scmp.eq.s32.totalorder %s13, 1
    %p108 = scmp.ne.s32.totalorder %s103, %s105
    %p109 = scmp.eq.s32.totalorder %s13, 0
    %p110 = por %p108, %p109
    %p111 = scmp.ne.s32.totalorder %s103, %s105
    %p112 = scmp.eq.s32.totalorder %s18, 1
    %p113 = por %p111, %p112
    %p114 = scmp.ne.s32.totalorder %s105, %s106
    %p115 = scmp.eq.s32.totalorder %s18, 0
    %p116 = por %p114, %p115
    %p117 = scmp.ne.s32.totalorder %s105, %s106
    %p118 = scmp.eq.s32.totalorder %s19, 1
    %p119 = por %p117, %p118
    %p121 = scmp.ne.s32.totalorder %s106, %s120
    %p122 = scmp.eq.s32.totalorder %s19, 0
    %p123 = por %p121, %p122
    %s125 = sadd.s32 %s124, 1
    %p128 = scmp.eq.s32.totalorder %s13, 1
    %p129 = scmp.ne.s32.totalorder %s124, %s126
    %p130 = scmp.eq.s32.totalorder %s13, 0
    %p131 = por %p129, %p130
    %p132 = scmp.ne.s32.totalorder %s124, %s126
    %p133 = scmp.eq.s32.totalorder %s18, 1
    %p134 = por %p132, %p133
    %p135 = scmp.ne.s32.totalorder %s126, %s127
    %p136 = scmp.eq.s32.totalorder %s18, 0
    %p137 = por %p135, %p136
    %p138 = scmp.ne.s32.totalorder %s126, %s127
    %p139 = scmp.eq.s32.totalorder %s19, 1
    %p140 = por %p138, %p139
    %p142 = scmp.ne.s32.totalorder %s127, %s141
    %p143 = scmp.eq.s32.totalorder %s19, 0
    %p144 = por %p142, %p143
    %s146 = sadd.s32 %s145, 1
    %p149 = scmp.eq.s32.totalorder %s13, 1
    %p150 = scmp.ne.s32.totalorder %s145, %s147
    %p151 = scmp.eq.s32.totalorder %s13, 0
    %p152 = por %p150, %p151
    %p153 = scmp.ne.s32.totalorder %s145, %s147
    %p154 = scmp.eq.s32.totalorder %s18, 1
    %p155 = por %p153, %p154
    %p156 = scmp.ne.s32.totalorder %s147, %s148
    %p157 = scmp.eq.s32.totalorder %s18, 0
    %p158 = por %p156, %p157
    %p159 = scmp.ne.s32.totalorder %s147, %s148
    %p160 = scmp.eq.s32.totalorder %s19, 1
    %p161 = por %p159, %p160
    %p163 = scmp.ne.s32.totalorder %s148, %s162
    %p164 = scmp.eq.s32.totalorder %s19, 0
    %p165 = por %p163, %p164
    %s167 = sadd.s32 %s166, 1
    %p170 = scmp.eq.s32.totalorder %s13, 1
    %p171 = scmp.ne.s32.totalorder %s166, %s168
    %p172 = scmp.eq.s32.totalorder %s13, 0
    %p173 = por %p171, %p172
    %p174 = scmp.ne.s32.totalorder %s166, %s168
    %p175 = scmp.eq.s32.totalorder %s18, 1
    %p176 = por %p174, %p175
    %p177 = scmp.ne.s32.totalorder %s168, %s169
    %p178 = scmp.eq.s32.totalorder %s18, 0
    %p179 = por %p177, %p178
    %p180 = scmp.ne.s32.totalorder %s168, %s169
    %p181 = scmp.eq.s32.totalorder %s19, 1
    %p182 = por %p180, %p181
    %p184 = scmp.ne.s32.totalorder %s169, %s183
    %p185 = scmp.eq.s32.totalorder %s19, 0
    %p186 = por %p184, %p185
    %s187 = ssub.s32 %s20, %s32
    %s188 = ssub.s32 %s21, %s28
    %s189 = sor.u32 %s187, %s188
    %p190 = scmp.eq.s32.totalorder %s189, 0
    %s192 = sadd.s32 %s191, 1
    %s193 = scalar_select %p190, %s191, %s192
    %p196 = pneg %p190
    %p197 = scmp.eq.s32.totalorder %s13, 1
    %p198 = por %p196, %p197
    %p199 = scmp.ne.s32.totalorder %s191, %s194
    %p200 = scmp.eq.s32.totalorder %s13, 0
    %p201 = por %p199, %p200
    %p202 = scmp.ne.s32.totalorder %s191, %s194
    %p203 = scmp.eq.s32.totalorder %s18, 1
    %p204 = por %p202, %p203
    %p205 = scmp.ne.s32.totalorder %s194, %s195
    %p206 = scmp.eq.s32.totalorder %s18, 0
    %p207 = por %p205, %p206
    %p208 = scmp.ne.s32.totalorder %s194, %s195
    %p209 = scmp.eq.s32.totalorder %s19, 1
    %p210 = por %p208, %p209
    %p212 = scmp.ne.s32.totalorder %s195, %s211
    %p213 = scmp.eq.s32.totalorder %s19, 0
    %p214 = por %p212, %p213
    %p215 = scmp.le.s32.totalorder 1, %s13
    %p216 = scmp.lt.s32.totalorder %s13, 3
    %p217 = pnand %p215, %p216
    %p218 = pneg %p217
    // Predicated region
    $region9: #{upconv_forward.1} parent=5 // pred_check
      _
    $region10: #{upconv_forward.1} parent=5 // pred_check_branch
      %220 = sbr.rel (%p217) target = $region12
    $region11: #{upconv_forward.1} parent=5 // pred_region
      %s221 = ssub.s32 %s13, 1
      // Predicated region
      $region13: #{upconv_forward.1} parent=11 // pred_check
        %p222 = pneg %p74
      $region14: #{upconv_forward.1} parent=11 // pred_check_branch
        %224 = sbr.rel (%p222) target = $region16
      $region15: #{upconv_forward.1} parent=11 // pred_region
        _
      $region16: #{upconv_forward.1} parent=11 // pred_fallthru
        _
      // Predicated region
      $region17: #{upconv_forward.1} parent=11 // pred_check
        %p225 = pneg %p95
      $region18: #{upconv_forward.1} parent=11 // pred_check_branch
        %227 = sbr.rel (%p225) target = $region20
      $region19: #{upconv_forward.1} parent=11 // pred_region
        _
      $region20: #{upconv_forward.1} parent=11 // pred_fallthru
        _
      // Predicated region
      $region21: #{upconv_forward.1} parent=11 // pred_check
        %p228 = pneg %p116
      $region22: #{upconv_forward.1} parent=11 // pred_check_branch
        %230 = sbr.rel (%p228) target = $region24
      $region23: #{upconv_forward.1} parent=11 // pred_region
        _
      $region24: #{upconv_forward.1} parent=11 // pred_fallthru
        _
      // Predicated region
      $region25: #{upconv_forward.1} parent=11 // pred_check
        %p231 = pneg %p137
      $region26: #{upconv_forward.1} parent=11 // pred_check_branch
        %233 = sbr.rel (%p231) target = $region28
      $region27: #{upconv_forward.1} parent=11 // pred_region
        _
      $region28: #{upconv_forward.1} parent=11 // pred_fallthru
        _
      // Predicated region
      $region29: #{upconv_forward.1} parent=11 // pred_check
        %p234 = pneg %p158
      $region30: #{upconv_forward.1} parent=11 // pred_check_branch
        %236 = sbr.rel (%p234) target = $region32
      $region31: #{upconv_forward.1} parent=11 // pred_region
        _
      $region32: #{upconv_forward.1} parent=11 // pred_fallthru
        _
      // Predicated region
      $region33: #{upconv_forward.1} parent=11 // pred_check
        %p237 = pneg %p179
      $region34: #{upconv_forward.1} parent=11 // pred_check_branch
        %239 = sbr.rel (%p237) target = $region36
      $region35: #{upconv_forward.1} parent=11 // pred_region
        _
      $region36: #{upconv_forward.1} parent=11 // pred_fallthru
        _
    $region12: #{upconv_forward.1} parent=5 // pred_fallthru
      _
    %p240 = scmp.lt.s32.totalorder %s13, 2
    // Predicated region
    $region37: #{upconv_forward.1} parent=5 // pred_check
      %p241 = pneg %p240
    $region38: #{upconv_forward.1} parent=5 // pred_check_branch
      %243 = sbr.rel (%p241) target = $region40
    $region39: #{upconv_forward.1} parent=5 // pred_region
      // Predicated region
      $region41: #{upconv_forward.1} parent=39 // pred_check
        %p244 = pneg %p47
      $region42: #{upconv_forward.1} parent=39 // pred_check_branch
        %246 = sbr.rel (%p244) target = $region44
      $region43: #{upconv_forward.1} parent=39 // pred_region
        %p247 = scmp.lt.s32.totalorder %s20, 1
        %s248 = scalar_select %p247, %s20, 1
        %p249 = scmp.lt.s32.totalorder %s21, 0
        %s250 = scalar_select %p249, %s21, 0
        %s251 = smul.addr %s250, 15
        %s252 = smul.addr %s248, 15
        %s253 = sadd.s32 %s251, %s252
        %s254 = smul.addr %s253, 4
        %s255 = scalar_lea.vmem %s0, %s254
      $region44: #{upconv_forward.1} parent=39 // pred_fallthru
        _
    $region40: #{upconv_forward.1} parent=5 // pred_fallthru
      _
    %p256 = scmp.le.s32.totalorder 1, %s13
    %p257 = scmp.lt.s32.totalorder %s13, 3
    %p258 = pnand %p256, %p257
    %p259 = pneg %p258
    // Predicated region
    $region45: #{upconv_forward.1} parent=5 // pred_check
      _
    $region46: #{upconv_forward.1} parent=5 // pred_check_branch
      %261 = sbr.rel (%p258) target = $region48
    $region47: #{upconv_forward.1} parent=5 // pred_region
      %s262 = ssub.s32 %s13, 1
      %p263 = scmp.lt.s32.totalorder %s22, 1
      %s264 = scalar_select %p263, %s22, 1
      %p265 = scmp.lt.s32.totalorder %s23, 0
      %s266 = scalar_select %p265, %s23, 0
      %s267 = smul.addr %s266, 15
      %s268 = smul.addr %s264, 15
      %s269 = sadd.s32 %s267, %s268
      %s270 = smul.addr %s269, 4
      %s271 = scalar_lea.vmem %s0, %s270
      %p272 = pneg %p53
      %p273 = pneg %p50
      %p274 = pneg %p74
      %p275 = pneg %p71
      %p276 = pneg %p95
      %p277 = pneg %p92
      %p278 = pneg %p116
      %p279 = pneg %p113
      %p280 = pneg %p137
      %p281 = pneg %p134
      %p282 = pneg %p158
      %p283 = pneg %p155
      %p284 = pneg %p179
      %p285 = pneg %p176
      %p286 = pneg %p207
      %p287 = pneg %p204
      %s288 = smul.u32 2, %s23
      %p289 = scmp.lt.s32.totalorder %s22, 1
      %s290 = scalar_select %p289, %s22, 1
      %p291 = scmp.lt.s32.totalorder %s288, 1
      %s292 = scalar_select %p291, %s288, 1
      %s293 = smul.addr %s290, 32
      %s294 = sadd.s32 %s292, %s293
      %s295 = smul.addr %s294, 8
      %s296 = scalar_lea.vmem %s7, %s295
      %p297 = scmp.lt.s32.totalorder %s22, 1
      %s298 = scalar_select %p297, %s22, 1
      %p299 = scmp.lt.s32.totalorder %s23, 0
      %s300 = scalar_select %p299, %s23, 0
      %s301 = smul.addr %s300, 15
      %s302 = smul.addr %s298, 15
      %s303 = sadd.s32 %s301, %s302
      %s304 = smul.addr %s303, 4
      %s305 = scalar_lea.vmem %s0, %s304
      %s306 = smul.u32 2, %s23
      %p307 = scmp.lt.s32.totalorder %s22, 1
      %s308 = scalar_select %p307, %s22, 1
      %p309 = scmp.lt.s32.totalorder %s306, 1
      %s310 = scalar_select %p309, %s306, 1
      %s311 = smul.addr %s308, 32
      %s312 = sadd.s32 %s310, %s311
      %s313 = smul.addr %s312, 8
      %s314 = scalar_lea.vmem %s7, %s313
      %s315 = smul.u32 2, %s23
      %v319 = vld [vmem:[%s305] sm:$0xff]
      %v320 = vld [vmem:[%s305 + $0x8] sm:$0xf]
      %v321 = vld [vmem:[%s305 + $0xc] sm:$0xff]
      %v322 = vld [vmem:[%s305 + $0x14] sm:$0xf]
      %v323 = vld [vmem:[%s305 + $0x18] sm:$0xff]
      %v324 = vld [vmem:[%s305 + $0x20] sm:$0xf]
      %v325 = vld [vmem:[%s305 + $0x24] sm:$0xff]
      %v326 = vld [vmem:[%s305 + $0x2c] sm:$0xf]
      %v327 = vld [vmem:[%s305 + $0x30] sm:$0x33]
      %v328 = vld [vmem:[%s305 + $0x38] sm:$0x3]
      %v329 = vld [vmem:[%s1] sm:$0xf]
      %v330 = vld [vmem:[%s1 + $0x4] sm:$0xf]
      %v331 = vld [vmem:[%s1 + $0x8] sm:$0xf]
      %v332 = vld [vmem:[%s1 + $0xc] sm:$0xf]
      %v333 = vld [vmem:[%s2] sm:$0xff]
      %v334 = vld [vmem:[%s2 + $0x8] sm:$0xff]
      %v335 = vld [vmem:[%s2 + $0x10] sm:$0xff]
      %v336 = vld [vmem:[%s2 + $0x18] sm:$0xff]
      %338 = vset.pattern.permute.xlu0 0
      %339 = vperm.xlu0 %338, %v333
      %v340 = vpop.permute.xlu0 %339
      %343 = vset.pattern.permute.xlu0 0
      %344 = vperm.xlu0 %343, %v334
      %v345 = vpop.permute.xlu0 %344
      %348 = vset.pattern.permute.xlu0 0
      %349 = vperm.xlu0 %348, %v335
      %v350 = vpop.permute.xlu0 %349
      %353 = vset.pattern.permute.xlu0 0
      %354 = vperm.xlu0 %353, %v336
      %v355 = vpop.permute.xlu0 %354
      %v361 = vunpack.c.l.b16 %v329
      %v362 = vunpack.c.l.b16 %v330
      %v363 = vunpack.c.l.b16 %v331
      %v364 = vunpack.c.l.b16 %v332
      %v365 = vpack.c.b16 %v362, %v361
      %v366 = vpack.c.b16 %v364, %v363
      %v377 = vunpack.c.l.b16 %v319
      %v378 = vunpack.c.h.b16 %v319
      %v379 = vunpack.c.l.b16 %v320
      %v380 = vunpack.c.l.b16 %v321
      %v381 = vunpack.c.h.b16 %v321
      %v382 = vunpack.c.l.b16 %v322
      %v383 = vunpack.c.l.b16 %v323
      %v384 = vunpack.c.h.b16 %v323
      %v385 = vunpack.c.l.b16 %v324
      %v386 = vunpack.c.l.b16 %v325
      %v387 = vunpack.c.h.b16 %v325
      %v388 = vunpack.c.l.b16 %v326
      %v389 = vunpack.c.l.b16 %v327
      %v390 = vunpack.c.h.b16 %v327
      %v391 = vunpack.c.l.b16 %v328
      %v392 = vpack.c.b16 %v380, %v377
      %v393 = vpack.c.b16 %v381, %v378
      %v394 = vpack.c.b16 %v382, %v379
      %v395 = vpack.c.b16 %v386, %v383
      %v396 = vpack.c.b16 %v387, %v384
      %v397 = vpack.c.b16 %v388, %v385
      %v398 = vpack.c.b16 %v389, %v389
      %v399 = vpack.c.b16 %v390, %v390
      %v400 = vpack.c.b16 %v391, %v391
      %vm407 = vcmask 293888
      %v409 = vsel %vm407, %v365, 0
      %v412 = vsel %vm407, %v366, 0
      %vm414 = vcmask 1041408
      %v416 = vsel %vm414, %v398, 0
      %v419 = vsel %vm414, %v399, 0
      %v422 = vsel %vm414, %v400, 0
      %424 = vmatprep.subr.bf16.mxu0 %v393
      %425 = vmatpush1.bf16.msra.mxu0 %v392
      %426 = vmatprep.subr.bf16.mxu0 %v396
      %427 = vmatpush1.bf16.msra.mxu0 %v395
      %428 = vmatprep.subr.bf16.mxu0 %v419
      %429 = vmatpush1.bf16.msra.mxu0 %v416
      %430 = vmatprep.subr.bf16.mxu0 0
      %431 = vmatpush1.bf16.msra.mxu0 0
      %432 = vmatprep.subr.bf16.mxu0 0
      %433 = vmatpush1.bf16.msra.mxu0 0
      %434 = vmatprep.subr.bf16.mxu0 0
      %435 = vmatpush1.bf16.msra.mxu0 0
      %436 = vmatprep.subr.bf16.mxu0 0
      %437 = vmatpush1.bf16.msra.mxu0 0
      %438 = vmatprep.subr.bf16.mxu0 0
      %439 = vmatpush1.bf16.msra.mxu0 0
      %440 = vmatprep.subr.bf16.mxu0 0
      %441 = vmatpush1.bf16.msra.mxu0 0
      %442 = vmatprep.subr.bf16.mxu0 0
      %443 = vmatpush1.bf16.msra.mxu0 0
      %444 = vmatprep.subr.bf16.mxu0 0
      %445 = vmatpush1.bf16.msra.mxu0 0
      %446 = vmatprep.subr.bf16.mxu0 0
      %447 = vmatpush1.bf16.msra.mxu0 0
      %448 = vmatprep.subr.bf16.mxu0 0
      %449 = vmatpush1.bf16.msra.mxu0 0
      %450 = vmatprep.subr.bf16.mxu0 0
      %451 = vmatpush1.bf16.msra.mxu0 0
      %452 = vmatprep.subr.bf16.mxu0 0
      %453 = vmatpush1.bf16.msra.mxu0 0
      %454 = vmatprep.subr.bf16.mxu0 0
      %455 = vmatpush1.bf16.msra.mxu0 0
      %456 = vmatprep.mubr.bf16.mxu0 0
      %457 = vmatmul.mubr.bf16.gmra.mrb[0].mxu0 %v409
      %v458 = vpop.f32.mrb[0].mxu0
      %v459 = vadd.f32 %v340, %v458
      %v460 = vpop.f32.mrb[0].mxu0
      %v461 = vadd.f32 %v340, %v460
      %v462 = vpop.f32.mrb[0].mxu0
      %v463 = vadd.f32 %v345, %v462
      %v464 = vpop.f32.mrb[0].mxu0
      %v465 = vadd.f32 %v345, %v464
      %466 = vmatprep.mubr.bf16.mxu0 0
      %467 = vmatmul.mubr.bf16.gmra.mrb[0].mxu0 %v412
      %v468 = vpop.f32.mrb[0].mxu0
      %v469 = vadd.f32 %v350, %v468
      %v470 = vpop.f32.mrb[0].mxu0
      %v471 = vadd.f32 %v350, %v470
      %v472 = vpop.f32.mrb[0].mxu0
      %v473 = vadd.f32 %v355, %v472
      %v474 = vpop.f32.mrb[0].mxu0
      %v475 = vadd.f32 %v355, %v474
      %476 = vdwg.mxu0
      %477 = vmatprep.subr.bf16.mxu0 0
      %478 = vmatpush1.bf16.msra.mxu0 %v394
      %479 = vmatprep.subr.bf16.mxu0 0
      %480 = vmatpush1.bf16.msra.mxu0 %v397
      %481 = vmatprep.subr.bf16.mxu0 0
      %482 = vmatpush1.bf16.msra.mxu0 %v422
      %483 = vmatprep.subr.bf16.mxu0 0
      %484 = vmatpush1.bf16.msra.mxu0 0
      %485 = vmatprep.subr.bf16.mxu0 0
      %486 = vmatpush1.bf16.msra.mxu0 0
      %487 = vmatprep.subr.bf16.mxu0 0
      %488 = vmatpush1.bf16.msra.mxu0 0
      %489 = vmatprep.subr.bf16.mxu0 0
      %490 = vmatpush1.bf16.msra.mxu0 0
      %491 = vmatprep.subr.bf16.mxu0 0
      %492 = vmatpush1.bf16.msra.mxu0 0
      %493 = vmatprep.subr.bf16.mxu0 0
      %494 = vmatpush1.bf16.msra.mxu0 0
      %495 = vmatprep.subr.bf16.mxu0 0
      %496 = vmatpush1.bf16.msra.mxu0 0
      %497 = vmatprep.subr.bf16.mxu0 0
      %498 = vmatpush1.bf16.msra.mxu0 0
      %499 = vmatprep.subr.bf16.mxu0 0
      %500 = vmatpush1.bf16.msra.mxu0 0
      %501 = vmatprep.subr.bf16.mxu0 0
      %502 = vmatpush1.bf16.msra.mxu0 0
      %503 = vmatprep.subr.bf16.mxu0 0
      %504 = vmatpush1.bf16.msra.mxu0 0
      %505 = vmatprep.subr.bf16.mxu0 0
      %506 = vmatpush1.bf16.msra.mxu0 0
      %507 = vmatprep.subr.bf16.mxu0 0
      %508 = vmatpush1.bf16.msra.mxu0 0
      %509 = vmatprep.mubr.bf16.mxu0 0
      %510 = vmatmul.mubr.bf16.gmra.mrb[0].mxu0 %v409
      %v511 = vpop.f32.mrb[0].mxu0
      %v512 = vadd.f32 %v340, %v511
      %v513 = vpop.f32.mrb[0].mxu0
      %v514 = vpop.f32.mrb[0].mxu0
      %v515 = vadd.f32 %v345, %v514
      %v516 = vpop.f32.mrb[0].mxu0
      %517 = vmatprep.mubr.bf16.mxu0 0
      %518 = vmatmul.mubr.bf16.gmra.mrb[0].mxu0 %v412
      %v519 = vpop.f32.mrb[0].mxu0
      %v520 = vadd.f32 %v350, %v519
      %v521 = vpop.f32.mrb[0].mxu0
      %v522 = vpop.f32.mrb[0].mxu0
      %v523 = vadd.f32 %v355, %v522
      %v524 = vpop.f32.mrb[0].mxu0
      %525 = vdwg.mxu0
      %v526 = vmax.f32 %v459, 0.0
      %v527 = vmax.f32 %v461, 0.0
      %v528 = vmax.f32 %v512, 0.0
      %v529 = vmax.f32 %v463, 0.0
      %v530 = vmax.f32 %v465, 0.0
      %v531 = vmax.f32 %v515, 0.0
      %v532 = vmax.f32 %v469, 0.0
      %v533 = vmax.f32 %v471, 0.0
      %v534 = vmax.f32 %v520, 0.0
      %v535 = vmax.f32 %v473, 0.0
      %v536 = vmax.f32 %v475, 0.0
      %v537 = vmax.f32 %v523, 0.0
      %v538 = vlaneseq
      %v539 = vand.u32 %v538, 127
      %v540 = vadd.s32 %v539, 128
      %v541 = vadd.s32 %v539, 256
      %p542 = scmp.eq.s32.totalorder %s23, 0
      %vm543 = vcmp.lt.s32.totalorder %v539, 16
      %vm544 = vcmp.lt.s32.totalorder %v540, 16
      %vm545 = vcmp.lt.s32.totalorder %v541, 16
      %s546 = scalar_select %p542, 1, 0
      %v547 = vstv %s546
      %vm548 = vcmp.eq.s32.totalorder %v547, 1
      %vm549 = vmand %vm548, %vm543
      %vm550 = vmand %vm548, %vm544
      %vm551 = vmand %vm548, %vm545
      %vm552 = vcmp.ge.s32.totalorder %v539, 272
      %vm553 = vcmp.ge.s32.totalorder %v540, 272
      %vm554 = vcmp.ge.s32.totalorder %v541, 272
      %vm555 = vmand %vm548, %vm552
      %vm556 = vmand %vm548, %vm553
      %vm557 = vmand %vm548, %vm554
      %vm558 = vmor %vm549, %vm555
      %vm559 = vmor %vm550, %vm556
      %vm560 = vmor %vm551, %vm557
      %v561 = vsel %vm558, 1, 0
      %v562 = vsel %vm559, 1, 0
      %v563 = vsel %vm560, 1, 0
      %vm564 = vcmp.eq.s32.totalorder %v561, 1
      %vm565 = vcmp.eq.s32.totalorder %v562, 1
      %vm566 = vcmp.eq.s32.totalorder %v563, 1
      %v567 = vsel %vm564, 0.0, %v526
      %v568 = vsel %vm565, 0.0, %v527
      %v569 = vsel %vm566, 0.0, %v528
      %v570 = vsel %vm564, 0.0, %v529
      %v571 = vsel %vm565, 0.0, %v530
      %v572 = vsel %vm566, 0.0, %v531
      %v573 = vsel %vm564, 0.0, %v532
      %v574 = vsel %vm565, 0.0, %v533
      %v575 = vsel %vm566, 0.0, %v534
      %v576 = vsel %vm564, 0.0, %v535
      %v577 = vsel %vm565, 0.0, %v536
      %v578 = vsel %vm566, 0.0, %v537
      %v579 = vpack.c.bf16 %v570, %v567
      %v580 = vpack.c.bf16 %v571, %v568
      %v581 = vpack.c.bf16 %v572, %v569
      %v582 = vpack.c.bf16 %v576, %v573
      %v583 = vpack.c.bf16 %v577, %v574
      %v584 = vpack.c.bf16 %v578, %v575
      %591 = vrot.lane.b32.xlu0 %v579, 1
      %v592 = vpop.permute.xlu0 %591
      %593 = vrot.lane.b32.xlu0 %v580, 1
      %v594 = vpop.permute.xlu0 %593
      %595 = vrot.lane.b32.xlu0 %v581, 1
      %v596 = vpop.permute.xlu0 %595
      %597 = vrot.lane.b32.xlu0 %v582, 1
      %v598 = vpop.permute.xlu0 %597
      %599 = vrot.lane.b32.xlu0 %v583, 1
      %v600 = vpop.permute.xlu0 %599
      %601 = vrot.lane.b32.xlu0 %v584, 1
      %v602 = vpop.permute.xlu0 %601
      %vm603 = vcmask 7168
      %v604 = vsel %vm603, %v592, %v594
      %v605 = vsel %vm603, %v594, %v596
      %v606 = vsel %vm603, %v598, %v600
      %v607 = vsel %vm603, %v600, %v602
      %vm610 = vcmask 7168
      %v613 = vsel %vm610, 0, %v592
      %v616 = vsel %vm610, 0, %v598
      %vm618 = vcmask 269312
      %v620 = vsel %vm618, %v605, 0
      %v623 = vsel %vm618, %v607, 0
      %vm625 = vcmp.lt.s32.totalorder %v539, 0
      %v626 = vsub.s32 0, %v539
      %v627 = vsel %vm625, %v626, %v539
      %v628 = vshrl.u32 %v627, 4
      %v629 = vand.u32 %v627, 15
      %v630 = vsub.s32 0, %v629
      %v631 = vsel %vm625, %v630, %v629
      %vm632 = vcmp.lt.s32.totalorder %v540, 0
      %v633 = vsub.s32 0, %v540
      %v634 = vsel %vm632, %v633, %v540
      %v635 = vshrl.u32 %v634, 4
      %v636 = vand.u32 %v634, 15
      %v637 = vsub.s32 0, %v636
      %v638 = vsel %vm632, %v637, %v636
      %vm639 = vcmp.ne.s32.totalorder %v631, 0
      %vm640 = vcmp.ne.s32.totalorder %v638, 0
      %vm641 = vcmp.lt.s32.totalorder %v631, 0
      %vm642 = vcmp.lt.s32.totalorder %v638, 0
      %vm643 = vmand %vm641, %vm639
      %vm644 = vmand %vm642, %vm640
      %v645 = vadd.s32 %v631, 16
      %v646 = vadd.s32 %v638, 16
      %v647 = vsel %vm643, %v645, %v631
      %v648 = vsel %vm644, %v646, %v638
      %vm649 = vcmp.ne.s32.totalorder %v647, 0
      %vm650 = vcmp.ne.s32.totalorder %v648, 0
      %vm651 = vcmp.ne.s32.totalorder %v647, 15
      %vm652 = vcmp.ne.s32.totalorder %v648, 15
      %v653 = vsel %vm649, 1, 0
      %v654 = vsel %vm650, 1, 0
      %vm655 = vcmp.eq.s32.totalorder %v653, 1
      %vm656 = vcmp.eq.s32.totalorder %v654, 1
      %vm657 = vmpackc.low %vm656, %vm655
      %v658 = vsel %vm657, 65537, 0
      %v659 = vlaneseq
      %v660 = vshrl.u32 %v659, 7
      %v661 = vsub.s32 0, %v660
      %v662 = vrot.slane %v658, %v661
      %v663 = vlaneseq
      %v664 = vshrl.u32 %v663, 7
      %v665 = vsub.s32 4, %v664
      %v666 = vrot.slane %v658, %v665
      %vm667 = vcmp.ne.s16.totalorder %v662, 0
      %vm668 = vcmp.ne.s16.totalorder %v666, 0
      %v669 = vsel %vm667, %v613, 0
      %v670 = vsel %vm668, %v604, 0
      %v671 = vsel %vm667, %v616, 0
      %v672 = vsel %vm668, %v606, 0
      %v673 = vsel %vm651, 1, 0
      %v674 = vsel %vm652, 1, 0
      %vm675 = vcmp.eq.s32.totalorder %v673, 1
      %vm676 = vcmp.eq.s32.totalorder %v674, 1
      %vm677 = vmpackc.low %vm676, %vm675
      %v678 = vsel %vm677, 65537, 0
      %v679 = vlaneseq
      %v680 = vshrl.u32 %v679, 7
      %v681 = vsub.s32 0, %v680
      %v682 = vrot.slane %v678, %v681
      %v683 = vlaneseq
      %v684 = vshrl.u32 %v683, 7
      %v685 = vsub.s32 4, %v684
      %v686 = vrot.slane %v678, %v685
      %687 = vrot.lane.b32.xlu0 %v682, 2
      %v688 = vpop.permute.xlu0 %687
      %689 = vrot.lane.b32.xlu0 %v686, 2
      %v690 = vpop.permute.xlu0 %689
      %vm691 = vcmask 15360
      %v692 = vsel %vm691, %v688, %v690
      %vm693 = vcmp.ne.s16.totalorder %v688, 0
      %vm694 = vcmp.ne.s16.totalorder %v692, 0
      %vm695 = vcmp.ne.s16.totalorder %v690, 0
      %v696 = vsel %vm693, %v613, 0
      %v697 = vsel %vm694, %v604, 0
      %v698 = vsel %vm695, %v620, 0
      %v699 = vsel %vm693, %v616, 0
      %v700 = vsel %vm694, %v606, 0
      %v701 = vsel %vm695, %v623, 0
      %702 = vrot.lane.b32.xlu0 %v662, 16
      %v703 = vpop.permute.xlu0 %702
      %704 = vrot.lane.b32.xlu0 %v666, 16
      %v705 = vpop.permute.xlu0 %704
      %vm706 = vcmask 130048
      %v707 = vsel %vm706, %v703, %v705
      %vm708 = vcmp.ne.s16.totalorder %v703, 0
      %vm709 = vcmp.ne.s16.totalorder %v707, 0
      %vm710 = vcmp.ne.s16.totalorder %v705, 0
      %v711 = vsel %vm708, %v613, 0
      %v712 = vsel %vm709, %v604, 0
      %v713 = vsel %vm710, %v620, 0
      %v714 = vsel %vm708, %v616, 0
      %v715 = vsel %vm709, %v606, 0
      %v716 = vsel %vm710, %v623, 0
      %717 = vrot.lane.b32.xlu0 %v682, 18
      %v718 = vpop.permute.xlu0 %717
      %719 = vrot.lane.b32.xlu0 %v686, 18
      %v720 = vpop.permute.xlu0 %719
      %vm721 = vcmask 146432
      %v722 = vsel %vm721, %v718, %v720
      %vm723 = vcmp.ne.s16.totalorder %v718, 0
      %vm724 = vcmp.ne.s16.totalorder %v722, 0
      %vm725 = vcmp.ne.s16.totalorder %v720, 0
      %v726 = vsel %vm723, %v613, 0
      %v727 = vsel %vm724, %v604, 0
      %v728 = vsel %vm725, %v620, 0
      %v729 = vsel %vm723, %v616, 0
      %v730 = vsel %vm724, %v606, 0
      %v731 = vsel %vm725, %v623, 0
      %732 = vrot.lane.b32.xlu0 %v662, 32
      %v733 = vpop.permute.xlu0 %732
      %734 = vrot.lane.b32.xlu0 %v666, 32
      %v735 = vpop.permute.xlu0 %734
      %vm736 = vcmask 261120
      %v737 = vsel %vm736, %v733, %v735
      %vm738 = vcmp.ne.s16.totalorder %v733, 0
      %vm739 = vcmp.ne.s16.totalorder %v737, 0
      %vm740 = vcmp.ne.s16.totalorder %v735, 0
      %v741 = vsel %vm738, %v613, 0
      %v742 = vsel %vm739, %v604, 0
      %v743 = vsel %vm740, %v620, 0
      %v744 = vsel %vm738, %v616, 0
      %v745 = vsel %vm739, %v606, 0
      %v746 = vsel %vm740, %v623, 0
      %747 = vrot.lane.b32.xlu0 %v682, 34
      %v748 = vpop.permute.xlu0 %747
      %749 = vrot.lane.b32.xlu0 %v686, 34
      %v750 = vpop.permute.xlu0 %749
      %vm751 = vcmask 277504
      %v752 = vsel %vm751, %v748, %v750
      %vm753 = vcmp.ne.s16.totalorder %v748, 0
      %vm754 = vcmp.ne.s16.totalorder %v752, 0
      %vm755 = vcmp.ne.s16.totalorder %v750, 0
      %v756 = vsel %vm753, %v613, 0
      %v757 = vsel %vm754, %v604, 0
      %v758 = vsel %vm755, %v620, 0
      %v759 = vsel %vm753, %v616, 0
      %v760 = vsel %vm754, %v606, 0
      %v761 = vsel %vm755, %v623, 0
      %766 = vrot.lane.b32.xlu0 %v613, 127
      %v767 = vpop.permute.xlu0 %766
      %768 = vrot.lane.b32.xlu0 %v604, 127
      %v769 = vpop.permute.xlu0 %768
      %770 = vrot.lane.b32.xlu0 %v620, 127
      %v771 = vpop.permute.xlu0 %770
      %772 = vrot.lane.b32.xlu0 %v616, 127
      %v773 = vpop.permute.xlu0 %772
      %774 = vrot.lane.b32.xlu0 %v606, 127
      %v775 = vpop.permute.xlu0 %774
      %776 = vrot.lane.b32.xlu0 %v623, 127
      %v777 = vpop.permute.xlu0 %776
      %vm778 = vcmask 1039360
      %v779 = vsel %vm778, %v767, %v769
      %v780 = vsel %vm778, %v769, %v771
      %v781 = vsel %vm778, %v773, %v775
      %v782 = vsel %vm778, %v775, %v777
      %793 = vrot.lane.b32.xlu0 %v696, 126
      %v794 = vpop.permute.xlu0 %793
      %795 = vrot.lane.b32.xlu0 %v697, 126
      %v796 = vpop.permute.xlu0 %795
      %797 = vrot.lane.b32.xlu0 %v698, 126
      %v798 = vpop.permute.xlu0 %797
      %799 = vrot.lane.b32.xlu0 %v699, 126
      %v800 = vpop.permute.xlu0 %799
      %801 = vrot.lane.b32.xlu0 %v700, 126
      %v802 = vpop.permute.xlu0 %801
      %803 = vrot.lane.b32.xlu0 %v701, 126
      %v804 = vpop.permute.xlu0 %803
      %vm805 = vcmask 1031168
      %v806 = vsel %vm805, %v794, %v796
      %v807 = vsel %vm805, %v796, %v798
      %v808 = vsel %vm805, %v800, %v802
      %v809 = vsel %vm805, %v802, %v804
      %820 = vrot.lane.b32.xlu0 %v711, 112
      %v821 = vpop.permute.xlu0 %820
      %822 = vrot.lane.b32.xlu0 %v712, 112
      %v823 = vpop.permute.xlu0 %822
      %824 = vrot.lane.b32.xlu0 %v713, 112
      %v825 = vpop.permute.xlu0 %824
      %826 = vrot.lane.b32.xlu0 %v714, 112
      %v827 = vpop.permute.xlu0 %826
      %828 = vrot.lane.b32.xlu0 %v715, 112
      %v829 = vpop.permute.xlu0 %828
      %830 = vrot.lane.b32.xlu0 %v716, 112
      %v831 = vpop.permute.xlu0 %830
      %vm832 = vcmask 916480
      %v833 = vsel %vm832, %v821, %v823
      %v834 = vsel %vm832, %v823, %v825
      %v835 = vsel %vm832, %v827, %v829
      %v836 = vsel %vm832, %v829, %v831
      %841 = vrot.lane.b32.xlu0 %v613, 111
      %v842 = vpop.permute.xlu0 %841
      %843 = vrot.lane.b32.xlu0 %v604, 111
      %v844 = vpop.permute.xlu0 %843
      %845 = vrot.lane.b32.xlu0 %v620, 111
      %v846 = vpop.permute.xlu0 %845
      %847 = vrot.lane.b32.xlu0 %v616, 111
      %v848 = vpop.permute.xlu0 %847
      %849 = vrot.lane.b32.xlu0 %v606, 111
      %v850 = vpop.permute.xlu0 %849
      %851 = vrot.lane.b32.xlu0 %v623, 111
      %v852 = vpop.permute.xlu0 %851
      %vm853 = vcmask 908288
      %v854 = vsel %vm853, %v842, %v844
      %v855 = vsel %vm853, %v844, %v846
      %v856 = vsel %vm853, %v848, %v850
      %v857 = vsel %vm853, %v850, %v852
      %868 = vrot.lane.b32.xlu0 %v726, 110
      %v869 = vpop.permute.xlu0 %868
      %870 = vrot.lane.b32.xlu0 %v727, 110
      %v871 = vpop.permute.xlu0 %870
      %872 = vrot.lane.b32.xlu0 %v728, 110
      %v873 = vpop.permute.xlu0 %872
      %874 = vrot.lane.b32.xlu0 %v729, 110
      %v875 = vpop.permute.xlu0 %874
      %876 = vrot.lane.b32.xlu0 %v730, 110
      %v877 = vpop.permute.xlu0 %876
      %878 = vrot.lane.b32.xlu0 %v731, 110
      %v879 = vpop.permute.xlu0 %878
      %vm880 = vcmask 900096
      %v881 = vsel %vm880, %v869, %v871
      %v882 = vsel %vm880, %v871, %v873
      %v883 = vsel %vm880, %v875, %v877
      %v884 = vsel %vm880, %v877, %v879
      %895 = vrot.lane.b32.xlu0 %v741, 96
      %v896 = vpop.permute.xlu0 %895
      %897 = vrot.lane.b32.xlu0 %v742, 96
      %v898 = vpop.permute.xlu0 %897
      %899 = vrot.lane.b32.xlu0 %v743, 96
      %v900 = vpop.permute.xlu0 %899
      %901 = vrot.lane.b32.xlu0 %v744, 96
      %v902 = vpop.permute.xlu0 %901
      %903 = vrot.lane.b32.xlu0 %v745, 96
      %v904 = vpop.permute.xlu0 %903
      %905 = vrot.lane.b32.xlu0 %v746, 96
      %v906 = vpop.permute.xlu0 %905
      %vm907 = vcmask 785408
      %v908 = vsel %vm907, %v896, %v898
      %v909 = vsel %vm907, %v898, %v900
      %v910 = vsel %vm907, %v902, %v904
      %v911 = vsel %vm907, %v904, %v906
      %916 = vrot.lane.b32.xlu0 %v613, 95
      %v917 = vpop.permute.xlu0 %916
      %918 = vrot.lane.b32.xlu0 %v604, 95
      %v919 = vpop.permute.xlu0 %918
      %920 = vrot.lane.b32.xlu0 %v620, 95
      %v921 = vpop.permute.xlu0 %920
      %922 = vrot.lane.b32.xlu0 %v616, 95
      %v923 = vpop.permute.xlu0 %922
      %924 = vrot.lane.b32.xlu0 %v606, 95
      %v925 = vpop.permute.xlu0 %924
      %926 = vrot.lane.b32.xlu0 %v623, 95
      %v927 = vpop.permute.xlu0 %926
      %vm928 = vcmask 777216
      %v929 = vsel %vm928, %v917, %v919
      %v930 = vsel %vm928, %v919, %v921
      %v931 = vsel %vm928, %v923, %v925
      %v932 = vsel %vm928, %v925, %v927
      %943 = vrot.lane.b32.xlu0 %v756, 94
      %v944 = vpop.permute.xlu0 %943
      %945 = vrot.lane.b32.xlu0 %v757, 94
      %v946 = vpop.permute.xlu0 %945
      %947 = vrot.lane.b32.xlu0 %v758, 94
      %v948 = vpop.permute.xlu0 %947
      %949 = vrot.lane.b32.xlu0 %v759, 94
      %v950 = vpop.permute.xlu0 %949
      %951 = vrot.lane.b32.xlu0 %v760, 94
      %v952 = vpop.permute.xlu0 %951
      %953 = vrot.lane.b32.xlu0 %v761, 94
      %v954 = vpop.permute.xlu0 %953
      %vm955 = vcmask 769024
      %v956 = vsel %vm955, %v944, %v946
      %v957 = vsel %vm955, %v946, %v948
      %v958 = vsel %vm955, %v950, %v952
      %v959 = vsel %vm955, %v952, %v954
      %v964 = vld [vmem:[%s3] sm:$0xff]
      %v965 = vld [vmem:[%s3 + $0x8] sm:$0xf]
      %v966 = vld [vmem:[%s3 + $0xc] sm:$0xff]
      %v967 = vld [vmem:[%s3 + $0x14] sm:$0xf]
      %v968 = vld [vmem:[%s3 + $0x18] sm:$0xff]
      %v969 = vld [vmem:[%s3 + $0x20] sm:$0xf]
      %v970 = vld [vmem:[%s3 + $0x24] sm:$0xff]
      %v971 = vld [vmem:[%s3 + $0x2c] sm:$0xf]
      %v972 = vld [vmem:[%s4] sm:$0xff]
      %v973 = vld [vmem:[%s4 + $0x8] sm:$0xff]
      %v974 = vld [vmem:[%s4 + $0x10] sm:$0xff]
      %v975 = vld [vmem:[%s4 + $0x18] sm:$0xff]
      %977 = vset.pattern.permute.xlu0 0
      %978 = vperm.xlu0 %977, %v972
      %v979 = vpop.permute.xlu0 %978
      %982 = vset.pattern.permute.xlu0 0
      %983 = vperm.xlu0 %982, %v973
      %v984 = vpop.permute.xlu0 %983
      %987 = vset.pattern.permute.xlu0 0
      %988 = vperm.xlu0 %987, %v974
      %v989 = vpop.permute.xlu0 %988
      %992 = vset.pattern.permute.xlu0 0
      %993 = vperm.xlu0 %992, %v975
      %v994 = vpop.permute.xlu0 %993
      %v1004 = vunpack.c.l.b16 %v964
      %v1005 = vunpack.c.h.b16 %v964
      %v1006 = vunpack.c.l.b16 %v965
      %v1007 = vunpack.c.l.b16 %v966
      %v1008 = vunpack.c.h.b16 %v966
      %v1009 = vunpack.c.l.b16 %v967
      %v1010 = vunpack.c.l.b16 %v968
      %v1011 = vunpack.c.h.b16 %v968
      %v1012 = vunpack.c.l.b16 %v969
      %v1013 = vunpack.c.l.b16 %v970
      %v1014 = vunpack.c.h.b16 %v970
      %v1015 = vunpack.c.l.b16 %v971
      %v1016 = vpack.c.b16 %v1007, %v1004
      %v1017 = vpack.c.b16 %v1008, %v1005
      %v1018 = vpack.c.b16 %v1009, %v1006
      %v1019 = vpack.c.b16 %v1013, %v1010
      %v1020 = vpack.c.b16 %v1014, %v1011
      %v1021 = vpack.c.b16 %v1015, %v1012
      %vm1026 = vcmask 261120
      %v1028 = vsel %vm1026, %v1018, 0
      %v1031 = vsel %vm1026, %v1021, 0
      %1033 = vmatprep.subr.bf16.mxu0 %v670
      %1034 = vmatpush1.bf16.msra.mxu0 %v669
      %1035 = vmatprep.subr.bf16.mxu0 %v672
      %1036 = vmatpush1.bf16.msra.mxu0 %v671
      %1037 = vmatprep.subr.bf16.mxu0 %v780
      %1038 = vmatpush1.bf16.msra.mxu0 %v779
      %1039 = vmatprep.subr.bf16.mxu0 %v782
      %1040 = vmatpush1.bf16.msra.mxu0 %v781
      %1041 = vmatprep.subr.bf16.mxu0 %v807
      %1042 = vmatpush1.bf16.msra.mxu0 %v806
      %1043 = vmatprep.subr.bf16.mxu0 %v809
      %1044 = vmatpush1.bf16.msra.mxu0 %v808
      %1045 = vmatprep.subr.bf16.mxu0 %v834
      %1046 = vmatpush1.bf16.msra.mxu0 %v833
      %1047 = vmatprep.subr.bf16.mxu0 %v836
      %1048 = vmatpush1.bf16.msra.mxu0 %v835
      %1049 = vmatprep.subr.bf16.mxu0 %v855
      %1050 = vmatpush1.bf16.msra.mxu0 %v854
      %1051 = vmatprep.subr.bf16.mxu0 %v857
      %1052 = vmatpush1.bf16.msra.mxu0 %v856
      %1053 = vmatprep.subr.bf16.mxu0 %v882
      %1054 = vmatpush1.bf16.msra.mxu0 %v881
      %1055 = vmatprep.subr.bf16.mxu0 %v884
      %1056 = vmatpush1.bf16.msra.mxu0 %v883
      %1057 = vmatprep.subr.bf16.mxu0 %v909
      %1058 = vmatpush1.bf16.msra.mxu0 %v908
      %1059 = vmatprep.subr.bf16.mxu0 %v911
      %1060 = vmatpush1.bf16.msra.mxu0 %v910
      %1061 = vmatprep.subr.bf16.mxu0 %v930
      %1062 = vmatpush1.bf16.msra.mxu0 %v929
      %1063 = vmatprep.subr.bf16.mxu0 %v932
      %1064 = vmatpush1.bf16.msra.mxu0 %v931
      %1065 = vmatprep.mubr.bf16.mxu0 %v1017
      %1066 = vmatmul.mubr.bf16.gmra.mrb[0].mxu0 %v1016
      %v1067 = vpop.f32.mrb[0].mxu0
      %v1068 = vadd.f32 %v979, %v1067
      %v1069 = vpop.f32.mrb[0].mxu0
      %v1070 = vadd.f32 %v979, %v1069
      %v1071 = vpop.f32.mrb[0].mxu0
      %v1072 = vadd.f32 %v984, %v1071
      %v1073 = vpop.f32.mrb[0].mxu0
      %v1074 = vadd.f32 %v984, %v1073
      %1075 = vmatprep.mubr.bf16.mxu0 %v1020
      %1076 = vmatmul.mubr.bf16.gmra.mrb[0].mxu0 %v1019
      %v1077 = vpop.f32.mrb[0].mxu0
      %v1078 = vadd.f32 %v989, %v1077
      %v1079 = vpop.f32.mrb[0].mxu0
      %v1080 = vadd.f32 %v989, %v1079
      %v1081 = vpop.f32.mrb[0].mxu0
      %v1082 = vadd.f32 %v994, %v1081
      %v1083 = vpop.f32.mrb[0].mxu0
      %v1084 = vadd.f32 %v994, %v1083
      %1085 = vdwg.mxu0
      %1086 = vmatprep.subr.bf16.mxu0 %v957
      %1087 = vmatpush1.bf16.msra.mxu0 %v956
      %1088 = vmatprep.subr.bf16.mxu0 %v959
      %1089 = vmatpush1.bf16.msra.mxu0 %v958
      %1090 = vmatprep.subr.bf16.mxu0 0
      %1091 = vmatpush1.bf16.msra.mxu0 0
      %1092 = vmatprep.subr.bf16.mxu0 0
      %1093 = vmatpush1.bf16.msra.mxu0 0
      %1094 = vmatprep.subr.bf16.mxu0 0
      %1095 = vmatpush1.bf16.msra.mxu0 0
      %1096 = vmatprep.subr.bf16.mxu0 0
      %1097 = vmatpush1.bf16.msra.mxu0 0
      %1098 = vmatprep.subr.bf16.mxu0 0
      %1099 = vmatpush1.bf16.msra.mxu0 0
      %1100 = vmatprep.subr.bf16.mxu0 0
      %1101 = vmatpush1.bf16.msra.mxu0 0
      %1102 = vmatprep.subr.bf16.mxu0 0
      %1103 = vmatpush1.bf16.msra.mxu0 0
      %1104 = vmatprep.subr.bf16.mxu0 0
      %1105 = vmatpush1.bf16.msra.mxu0 0
      %1106 = vmatprep.subr.bf16.mxu0 0
      %1107 = vmatpush1.bf16.msra.mxu0 0
      %1108 = vmatprep.subr.bf16.mxu0 0
      %1109 = vmatpush1.bf16.msra.mxu0 0
      %1110 = vmatprep.subr.bf16.mxu0 0
      %1111 = vmatpush1.bf16.msra.mxu0 0
      %1112 = vmatprep.subr.bf16.mxu0 0
      %1113 = vmatpush1.bf16.msra.mxu0 0
      %1114 = vmatprep.subr.bf16.mxu0 0
      %1115 = vmatpush1.bf16.msra.mxu0 0
      %1116 = vmatprep.subr.bf16.mxu0 0
      %1117 = vmatpush1.bf16.msra.mxu0 0
      %1118 = vmatprep.mubr.bf16.mxu0 0
      %1119 = vmatmul.mubr.bf16.gmra.mrb[0].mxu0 %v1028
      %v1120 = vpop.f32.mrb[0].mxu0
      %v1121 = vadd.f32 %v1068, %v1120
      %v1122 = vpop.f32.mrb[0].mxu0
      %v1123 = vadd.f32 %v1070, %v1122
      %v1124 = vpop.f32.mrb[0].mxu0
      %v1125 = vadd.f32 %v1072, %v1124
      %v1126 = vpop.f32.mrb[0].mxu0
      %v1127 = vadd.f32 %v1074, %v1126
      %1128 = vmatprep.mubr.bf16.mxu0 0
      %1129 = vmatmul.mubr.bf16.gmra.mrb[0].mxu0 %v1031
      %v1130 = vpop.f32.mrb[0].mxu0
      %v1131 = vadd.f32 %v1078, %v1130
      %v1132 = vpop.f32.mrb[0].mxu0
      %v1133 = vadd.f32 %v1080, %v1132
      %v1134 = vpop.f32.mrb[0].mxu0
      %v1135 = vadd.f32 %v1082, %v1134
      %v1136 = vpop.f32.mrb[0].mxu0
      %v1137 = vadd.f32 %v1084, %v1136
      %1138 = vdwg.mxu0
      %v1139 = vmax.f32 %v1121, 0.0
      %v1140 = vmax.f32 %v1123, 0.0
      %v1141 = vmax.f32 %v1125, 0.0
      %v1142 = vmax.f32 %v1127, 0.0
      %v1143 = vmax.f32 %v1131, 0.0
      %v1144 = vmax.f32 %v1133, 0.0
      %v1145 = vmax.f32 %v1135, 0.0
      %v1146 = vmax.f32 %v1137, 0.0
      %v1147 = vpack.c.bf16 %v1141, %v1139
      %v1148 = vpack.c.bf16 %v1142, %v1140
      %v1149 = vpack.c.bf16 %v1145, %v1143
      %v1150 = vpack.c.bf16 %v1146, %v1144
      %v1151 = vld [vmem:[%s5] sm:$0xf]
      %v1152 = vld [vmem:[%s5 + $0x4] sm:$0xf]
      %v1153 = vld [vmem:[%s5 + $0x8] sm:$0xf]
      %v1154 = vld [vmem:[%s5 + $0xc] sm:$0xf]
      %v1155 = vld [vmem:[%s5 + $0x10] sm:$0xf]
      %v1156 = vld [vmem:[%s5 + $0x14] sm:$0xf]
      %v1157 = vld [vmem:[%s5 + $0x18] sm:$0xf]
      %v1158 = vld [vmem:[%s5 + $0x1c] sm:$0xf]
      %v1159 = vld [vmem:[%s5 + $0x20] sm:$0xf]
      %v1160 = vld [vmem:[%s5 + $0x24] sm:$0xf]
      %v1161 = vld [vmem:[%s5 + $0x28] sm:$0xf]
      %v1162 = vld [vmem:[%s5 + $0x2c] sm:$0xf]
      %v1163 = vld [vmem:[%s5 + $0x30] sm:$0xf]
      %v1164 = vld [vmem:[%s5 + $0x34] sm:$0xf]
      %v1165 = vld [vmem:[%s5 + $0x38] sm:$0xf]
      %v1166 = vld [vmem:[%s5 + $0x3c] sm:$0xf]
      %v1167 = vld [vmem:[%s6] sm:$0xff]
      %v1168 = vld [vmem:[%s6 + $0x8] sm:$0xff]
      %v1169 = vld [vmem:[%s6 + $0x10] sm:$0xff]
      %v1170 = vld [vmem:[%s6 + $0x18] sm:$0xff]
      %v1171 = vld [vmem:[%s6 + $0x20] sm:$0xff]
      %v1172 = vld [vmem:[%s6 + $0x28] sm:$0xff]
      %v1173 = vld [vmem:[%s6 + $0x30] sm:$0xff]
      %v1174 = vld [vmem:[%s6 + $0x38] sm:$0xff]
      %v1175 = vld [vmem:[%s6 + $0x40] sm:$0xff]
      %v1176 = vld [vmem:[%s6 + $0x48] sm:$0xff]
      %v1177 = vld [vmem:[%s6 + $0x50] sm:$0xff]
      %v1178 = vld [vmem:[%s6 + $0x58] sm:$0xff]
      %v1179 = vld [vmem:[%s6 + $0x60] sm:$0xff]
      %v1180 = vld [vmem:[%s6 + $0x68] sm:$0xff]
      %v1181 = vld [vmem:[%s6 + $0x70] sm:$0xff]
      %v1182 = vld [vmem:[%s6 + $0x78] sm:$0xff]
      %1184 = vset.pattern.permute.xlu0 0
      %1185 = vperm.xlu0 %1184, %v1167
      %v1186 = vpop.permute.xlu0 %1185
      %1189 = vset.pattern.permute.xlu0 0
      %1190 = vperm.xlu0 %1189, %v1168
      %v1191 = vpop.permute.xlu0 %1190
      %1194 = vset.pattern.permute.xlu0 0
      %1195 = vperm.xlu0 %1194, %v1169
      %v1196 = vpop.permute.xlu0 %1195
      %1199 = vset.pattern.permute.xlu0 0
      %1200 = vperm.xlu0 %1199, %v1170
      %v1201 = vpop.permute.xlu0 %1200
      %1204 = vset.pattern.permute.xlu0 0
      %1205 = vperm.xlu0 %1204, %v1171
      %v1206 = vpop.permute.xlu0 %1205
      %1209 = vset.pattern.permute.xlu0 0
      %1210 = vperm.xlu0 %1209, %v1172
      %v1211 = vpop.permute.xlu0 %1210
      %1214 = vset.pattern.permute.xlu0 0
      %1215 = vperm.xlu0 %1214, %v1173
      %v1216 = vpop.permute.xlu0 %1215
      %1219 = vset.pattern.permute.xlu0 0
      %1220 = vperm.xlu0 %1219, %v1174
      %v1221 = vpop.permute.xlu0 %1220
      %1224 = vset.pattern.permute.xlu0 0
      %1225 = vperm.xlu0 %1224, %v1175
      %v1226 = vpop.permute.xlu0 %1225
      %1229 = vset.pattern.permute.xlu0 0
      %1230 = vperm.xlu0 %1229, %v1176
      %v1231 = vpop.permute.xlu0 %1230
      %1234 = vset.pattern.permute.xlu0 0
      %1235 = vperm.xlu0 %1234, %v1177
      %v1236 = vpop.permute.xlu0 %1235
      %1239 = vset.pattern.permute.xlu0 0
      %1240 = vperm.xlu0 %1239, %v1178
      %v1241 = vpop.permute.xlu0 %1240
      %1244 = vset.pattern.permute.xlu0 0
      %1245 = vperm.xlu0 %1244, %v1179
      %v1246 = vpop.permute.xlu0 %1245
      %1249 = vset.pattern.permute.xlu0 0
      %1250 = vperm.xlu0 %1249, %v1180
      %v1251 = vpop.permute.xlu0 %1250
      %1254 = vset.pattern.permute.xlu0 0
      %1255 = vperm.xlu0 %1254, %v1181
      %v1256 = vpop.permute.xlu0 %1255
      %1259 = vset.pattern.permute.xlu0 0
      %1260 = vperm.xlu0 %1259, %v1182
      %v1261 = vpop.permute.xlu0 %1260
      %v1279 = vunpack.c.l.b16 %v1151
      %v1280 = vunpack.c.l.b16 %v1152
      %v1281 = vunpack.c.l.b16 %v1153
      %v1282 = vunpack.c.l.b16 %v1154
      %v1283 = vunpack.c.l.b16 %v1155
      %v1284 = vunpack.c.l.b16 %v1156
      %v1285 = vunpack.c.l.b16 %v1157
      %v1286 = vunpack.c.l.b16 %v1158
      %v1287 = vunpack.c.l.b16 %v1159
      %v1288 = vunpack.c.l.b16 %v1160
      %v1289 = vunpack.c.l.b16 %v1161
      %v1290 = vunpack.c.l.b16 %v1162
      %v1291 = vunpack.c.l.b16 %v1163
      %v1292 = vunpack.c.l.b16 %v1164
      %v1293 = vunpack.c.l.b16 %v1165
      %v1294 = vunpack.c.l.b16 %v1166
      %v1295 = vpack.c.b16 %v1280, %v1279
      %v1296 = vpack.c.b16 %v1282, %v1281
      %v1297 = vpack.c.b16 %v1284, %v1283
      %v1298 = vpack.c.b16 %v1286, %v1285
      %v1299 = vpack.c.b16 %v1288, %v1287
      %v1300 = vpack.c.b16 %v1290, %v1289
      %v1301 = vpack.c.b16 %v1292, %v1291
      %v1302 = vpack.c.b16 %v1294, %v1293
      %v1304 = vsel %vm1026, %v1295, 0
      %v1307 = vsel %vm1026, %v1296, 0
      %v1310 = vsel %vm1026, %v1297, 0
      %v1313 = vsel %vm1026, %v1298, 0
      %v1316 = vsel %vm1026, %v1299, 0
      %v1319 = vsel %vm1026, %v1300, 0
      %v1322 = vsel %vm1026, %v1301, 0
      %v1325 = vsel %vm1026, %v1302, 0
      %1327 = vmatprep.subr.bf16.mxu0 %v1148
      %1328 = vmatpush1.bf16.msra.mxu0 %v1147
      %1329 = vmatprep.subr.bf16.mxu0 %v1150
      %1330 = vmatpush1.bf16.msra.mxu0 %v1149
      %1331 = vmatprep.subr.bf16.mxu0 0
      %1332 = vmatpush1.bf16.msra.mxu0 0
      %1333 = vmatprep.subr.bf16.mxu0 0
      %1334 = vmatpush1.bf16.msra.mxu0 0
      %1335 = vmatprep.subr.bf16.mxu0 0
      %1336 = vmatpush1.bf16.msra.mxu0 0
      %1337 = vmatprep.subr.bf16.mxu0 0
      %1338 = vmatpush1.bf16.msra.mxu0 0
      %1339 = vmatprep.subr.bf16.mxu0 0
      %1340 = vmatpush1.bf16.msra.mxu0 0
      %1341 = vmatprep.subr.bf16.mxu0 0
      %1342 = vmatpush1.bf16.msra.mxu0 0
      %1343 = vmatprep.subr.bf16.mxu0 0
      %1344 = vmatpush1.bf16.msra.mxu0 0
      %1345 = vmatprep.subr.bf16.mxu0 0
      %1346 = vmatpush1.bf16.msra.mxu0 0
      %1347 = vmatprep.subr.bf16.mxu0 0
      %1348 = vmatpush1.bf16.msra.mxu0 0
      %1349 = vmatprep.subr.bf16.mxu0 0
      %1350 = vmatpush1.bf16.msra.mxu0 0
      %1351 = vmatprep.subr.bf16.mxu0 0
      %1352 = vmatpush1.bf16.msra.mxu0 0
      %1353 = vmatprep.subr.bf16.mxu0 0
      %1354 = vmatpush1.bf16.msra.mxu0 0
      %1355 = vmatprep.subr.bf16.mxu0 0
      %1356 = vmatpush1.bf16.msra.mxu0 0
      %1357 = vmatprep.subr.bf16.mxu0 0
      %1358 = vmatpush1.bf16.msra.mxu0 0
      %1359 = vmatprep.mubr.bf16.mxu0 0
      %1360 = vmatmul.mubr.bf16.gmra.mrb[0].mxu0 %v1304
      %v1361 = vpop.f32.mrb[0].mxu0
      %v1362 = vadd.f32 %v1186, %v1361
      %v1363 = vpop.f32.mrb[0].mxu0
      %v1364 = vadd.f32 %v1186, %v1363
      %v1365 = vpop.f32.mrb[0].mxu0
      %v1366 = vadd.f32 %v1191, %v1365
      %v1367 = vpop.f32.mrb[0].mxu0
      %v1368 = vadd.f32 %v1191, %v1367
      %1369 = vmatprep.mubr.bf16.mxu0 0
      %1370 = vmatmul.mubr.bf16.gmra.mrb[0].mxu0 %v1307
      %v1371 = vpop.f32.mrb[0].mxu0
      %v1372 = vadd.f32 %v1196, %v1371
      %v1373 = vpop.f32.mrb[0].mxu0
      %v1374 = vadd.f32 %v1196, %v1373
      %v1375 = vpop.f32.mrb[0].mxu0
      %v1376 = vadd.f32 %v1201, %v1375
      %v1377 = vpop.f32.mrb[0].mxu0
      %v1378 = vadd.f32 %v1201, %v1377
      %1379 = vmatprep.mubr.bf16.mxu0 0
      %1380 = vmatmul.mubr.bf16.gmra.mrb[0].mxu0 %v1310
      %v1381 = vpop.f32.mrb[0].mxu0
      %v1382 = vadd.f32 %v1206, %v1381
      %v1383 = vpop.f32.mrb[0].mxu0
      %v1384 = vadd.f32 %v1206, %v1383
      %v1385 = vpop.f32.mrb[0].mxu0
      %v1386 = vadd.f32 %v1211, %v1385
      %v1387 = vpop.f32.mrb[0].mxu0
      %v1388 = vadd.f32 %v1211, %v1387
      %1389 = vmatprep.mubr.bf16.mxu0 0
      %1390 = vmatmul.mubr.bf16.gmra.mrb[0].mxu0 %v1313
      %v1391 = vpop.f32.mrb[0].mxu0
      %v1392 = vadd.f32 %v1216, %v1391
      %v1393 = vpop.f32.mrb[0].mxu0
      %v1394 = vadd.f32 %v1216, %v1393
      %v1395 = vpop.f32.mrb[0].mxu0
      %v1396 = vadd.f32 %v1221, %v1395
      %v1397 = vpop.f32.mrb[0].mxu0
      %v1398 = vadd.f32 %v1221, %v1397
      %1399 = vmatprep.mubr.bf16.mxu0 0
      %1400 = vmatmul.mubr.bf16.gmra.mrb[0].mxu0 %v1316
      %v1401 = vpop.f32.mrb[0].mxu0
      %v1402 = vadd.f32 %v1226, %v1401
      %v1403 = vpop.f32.mrb[0].mxu0
      %v1404 = vadd.f32 %v1226, %v1403
      %v1405 = vpop.f32.mrb[0].mxu0
      %v1406 = vadd.f32 %v1231, %v1405
      %v1407 = vpop.f32.mrb[0].mxu0
      %v1408 = vadd.f32 %v1231, %v1407
      %1409 = vmatprep.mubr.bf16.mxu0 0
      %1410 = vmatmul.mubr.bf16.gmra.mrb[0].mxu0 %v1319
      %v1411 = vpop.f32.mrb[0].mxu0
      %v1412 = vadd.f32 %v1236, %v1411
      %v1413 = vpop.f32.mrb[0].mxu0
      %v1414 = vadd.f32 %v1236, %v1413
      %v1415 = vpop.f32.mrb[0].mxu0
      %v1416 = vadd.f32 %v1241, %v1415
      %v1417 = vpop.f32.mrb[0].mxu0
      %v1418 = vadd.f32 %v1241, %v1417
      %1419 = vmatprep.mubr.bf16.mxu0 0
      %1420 = vmatmul.mubr.bf16.gmra.mrb[0].mxu0 %v1322
      %v1421 = vpop.f32.mrb[0].mxu0
      %v1422 = vadd.f32 %v1246, %v1421
      %v1423 = vpop.f32.mrb[0].mxu0
      %v1424 = vadd.f32 %v1246, %v1423
      %v1425 = vpop.f32.mrb[0].mxu0
      %v1426 = vadd.f32 %v1251, %v1425
      %v1427 = vpop.f32.mrb[0].mxu0
      %v1428 = vadd.f32 %v1251, %v1427
      %1429 = vmatprep.mubr.bf16.mxu0 0
      %1430 = vmatmul.mubr.bf16.gmra.mrb[0].mxu0 %v1325
      %v1431 = vpop.f32.mrb[0].mxu0
      %v1432 = vadd.f32 %v1256, %v1431
      %v1433 = vpop.f32.mrb[0].mxu0
      %v1434 = vadd.f32 %v1256, %v1433
      %v1435 = vpop.f32.mrb[0].mxu0
      %v1436 = vadd.f32 %v1261, %v1435
      %v1437 = vpop.f32.mrb[0].mxu0
      %v1438 = vadd.f32 %v1261, %v1437
      %1439 = vdwg.mxu0
      %1440 = vst [vmem:[%s314] sm:$0xff] %v1362
      %1441 = vst [vmem:[%s314 + $0x8] sm:$0xff] %v1364
      %1442 = vst [vmem:[%s314 + $0x10] sm:$0xff] %v1366
      %1443 = vst [vmem:[%s314 + $0x18] sm:$0xff] %v1368
      %1444 = vst [vmem:[%s314 + $0x20] sm:$0xff] %v1372
      %1445 = vst [vmem:[%s314 + $0x28] sm:$0xff] %v1374
      %1446 = vst [vmem:[%s314 + $0x30] sm:$0xff] %v1376
      %1447 = vst [vmem:[%s314 + $0x38] sm:$0xff] %v1378
      %1448 = vst [vmem:[%s314 + $0x40] sm:$0xff] %v1382
      %1449 = vst [vmem:[%s314 + $0x48] sm:$0xff] %v1384
      %1450 = vst [vmem:[%s314 + $0x50] sm:$0xff] %v1386
      %1451 = vst [vmem:[%s314 + $0x58] sm:$0xff] %v1388
      %1452 = vst [vmem:[%s314 + $0x60] sm:$0xff] %v1392
      %1453 = vst [vmem:[%s314 + $0x68] sm:$0xff] %v1394
      %1454 = vst [vmem:[%s314 + $0x70] sm:$0xff] %v1396
      %1455 = vst [vmem:[%s314 + $0x78] sm:$0xff] %v1398
      %1456 = vst [vmem:[%s314 + $0x80] sm:$0xff] %v1402
      %1457 = vst [vmem:[%s314 + $0x88] sm:$0xff] %v1404
      %1458 = vst [vmem:[%s314 + $0x90] sm:$0xff] %v1406
      %1459 = vst [vmem:[%s314 + $0x98] sm:$0xff] %v1408
      %1460 = vst [vmem:[%s314 + $0xa0] sm:$0xff] %v1412
      %1461 = vst [vmem:[%s314 + $0xa8] sm:$0xff] %v1414
      %1462 = vst [vmem:[%s314 + $0xb0] sm:$0xff] %v1416
      %1463 = vst [vmem:[%s314 + $0xb8] sm:$0xff] %v1418
      %1464 = vst [vmem:[%s314 + $0xc0] sm:$0xff] %v1422
      %1465 = vst [vmem:[%s314 + $0xc8] sm:$0xff] %v1424
      %1466 = vst [vmem:[%s314 + $0xd0] sm:$0xff] %v1426
      %1467 = vst [vmem:[%s314 + $0xd8] sm:$0xff] %v1428
      %1468 = vst [vmem:[%s314 + $0xe0] sm:$0xff] %v1432
      %1469 = vst [vmem:[%s314 + $0xe8] sm:$0xff] %v1434
      %1470 = vst [vmem:[%s314 + $0xf0] sm:$0xff] %v1436
      %1471 = vst [vmem:[%s314 + $0xf8] sm:$0xff] %v1438
      %s1472 = smul.u32 2, %s23
      %p1473 = scmp.lt.s32.totalorder %s22, 1
      %s1474 = scalar_select %p1473, %s22, 1
      %p1475 = scmp.lt.s32.totalorder %s1472, 1
      %s1476 = scalar_select %p1475, %s1472, 1
      %s1477 = smul.addr %s1474, 32
      %s1478 = sadd.s32 %s1476, %s1477
      %s1479 = smul.addr %s1478, 8
      %s1480 = scalar_lea.vmem %s7, %s1479
      // Predicated region
      $region49: #{upconv_forward.1} parent=47 // pred_check
        %p1481 = pneg %p204
      $region50: #{upconv_forward.1} parent=47 // pred_check_branch
        %1483 = sbr.rel (%p1481) target = $region52
      $region51: #{upconv_forward.1} parent=47 // pred_region
        %s1484 = smul.u32 2, %s23
      $region52: #{upconv_forward.1} parent=47 // pred_fallthru
        _
    $region48: #{upconv_forward.1} parent=5 // pred_fallthru
      _
    %p1485 = scmp.le.s32.totalorder 2, %s13
    // Predicated region
    $region53: #{upconv_forward.1} parent=5 // pred_check
      %p1486 = pneg %p1485
    $region54: #{upconv_forward.1} parent=5 // pred_check_branch
      %1488 = sbr.rel (%p1486) target = $region56
    $region55: #{upconv_forward.1} parent=5 // pred_region
      %s1489 = ssub.s32 %s13, 2
      // Predicated region
      $region57: #{upconv_forward.1} parent=55 // pred_check
        %p1490 = pneg %p210
      $region58: #{upconv_forward.1} parent=55 // pred_check_branch
        %1492 = sbr.rel (%p1490) target = $region60
      $region59: #{upconv_forward.1} parent=55 // pred_region
        %s1493 = smul.u32 2, %s25
        %p1494 = scmp.lt.s32.totalorder %s24, 1
        %s1495 = scalar_select %p1494, %s24, 1
        %p1496 = scmp.lt.s32.totalorder %s1493, 1
        %s1497 = scalar_select %p1496, %s1493, 1
        %s1498 = smul.addr %s1495, 32
        %s1499 = sadd.s32 %s1497, %s1498
        %s1500 = smul.addr %s1499, 8
        %s1501 = scalar_lea.vmem %s7, %s1500
      $region60: #{upconv_forward.1} parent=55 // pred_fallthru
        _
    $region56: #{upconv_forward.1} parent=5 // pred_fallthru
      _
  $region6: #{upconv_forward.1} parent=0 // loop_footer
    %s17 = sadd.s32 1, %s13
  $region7: #{upconv_forward.1} parent=0 // loop_footer_branch
    %12 = sbr.rel target = $region3
  $region8: #{upconv_forward.1} parent=0 // loop_exit
    _

</llo_original>
